<compile_context>
chip_gen: v7x
topology: tpu7x:2x2x1
jax: 0.10.0
libtpu: 0.0.40
codegen_flags: <defaults>
</compile_context>

<pallas_src>
import functools

import jax
import jax.numpy as jnp
from jax.experimental import pallas as pl
from jax.experimental.pallas import tpu as pltpu

C_HID = 8          # hidden channels of the synthesized ResEncoder
_PAD = 128         # lane padding on each side of the flattened feature scratch

_PI = 3.141592653589793
_INV_PI = 0.3183098861837907


def _sincos(x):
    """(sin(x), cos(x)) with one shared range reduction to [-pi/2, pi/2].

    Uses only mul/add/floor (guaranteed TPU/Mosaic lowering); |err| < 1e-6.
    sin(x) = (-1)^k * sin(r),  cos(x) = (-1)^k * cos(r),  x = k*pi + r.
    """
    k = jnp.floor(x * _INV_PI + 0.5)
    r = x - k * _PI
    sign = 1.0 - 2.0 * (k - 2.0 * jnp.floor(0.5 * k))     # (-1)**k
    r2 = r * r
    sp = 1.0 + r2 * (-1.0 / 6.0 + r2 * (1.0 / 120.0 + r2 * (-1.0 / 5040.0
        + r2 * (1.0 / 362880.0 + r2 * (-1.0 / 39916800.0)))))
    cp = 1.0 + r2 * (-0.5 + r2 * (1.0 / 24.0 + r2 * (-1.0 / 720.0
        + r2 * (1.0 / 40320.0 + r2 * (-1.0 / 3628800.0)))))
    return sign * (r * sp), sign * cp


def rersm_kernel(x_ref, w1_ref, w2_ref, w3_ref, small_ref, basis_ref, mask_ref,
                 phase_ref, cos_ref, sin_ref, buf_ref, *, W, offsets):
    """One batch band, fully fused: 3 convs + residual + pool + head + basis + trig.

    x_ref     : (C, M)   lane-dense input, M = batch_block*H*W (channels padded to C)
    w*_ref    : (C, 9*C) im2col weight matrices
    small_ref : (C, 4)   columns = [b1 | b2 | b3 | wh]
    basis_ref : (1, M)   carrier basis expanded to the flat layout (+ head bias)
    mask_ref  : (9, M)   3x3 tap validity masks (image-edge handling)
    buf_ref   : (C, M+2*_PAD) zero-bordered flat scratch for the tap windows
    outputs   : (1, 1, M) phase / cos(phase) / sin(phase) rows (valid at even-h)
    """
    C, M = x_ref.shape

    # Zero only the two 128-lane border blocks of the scratch.  The interior is
    # fully rewritten before every read, so steps stay independent (safe under
    # "parallel" semantics); with the default single-step grid this runs once.
    zeros_pad = jnp.zeros((C, _PAD), jnp.float32)
    buf_ref[:, :_PAD] = zeros_pad
    buf_ref[:, _PAD + M:] = zeros_pad

    def conv3x3(feat, w_ref):
        # im2col: place feat in the zero-bordered scratch, read 9 lane-shifted
        # windows, mask image edges (center tap never needs masking), and run
        # ONE (C,9C)x(9C,M) MXU matmul.
        buf_ref[:, _PAD:_PAD + M] = feat
        taps = []
        for t, off in enumerate(offsets):
            window = buf_ref[:, _PAD + off:_PAD + off + M]       # (C, M)
            if off != 0:                                         # static (Python) check
                window = window * mask_ref[t:t + 1, :]
            taps.append(window)
        patch = jnp.concatenate(taps, axis=0)                    # (9C, M)
        return jnp.dot(w_ref[...], patch,
                       preferred_element_type=jnp.float32)       # (C, M)

    b1 = small_ref[:, 0:1]
    b2 = small_ref[:, 1:2]
    b3 = small_ref[:, 2:3]
    wh = small_ref[:, 3:4]

    h1 = jnp.maximum(conv3x3(x_ref[...], w1_ref) + b1, 0.0)      # stem conv
    h2 = jnp.maximum(conv3x3(h1, w2_ref) + b2, 0.0)              # res conv a
    h3 = jnp.maximum(conv3x3(h2, w3_ref) + b3 + h1, 0.0)         # res conv b + skip

    # 1x1 head (channel reduction).  It is linear, so it commutes with the
    # (2,1) average pool and can be applied first on the lane-dense layout.
    yfull = jnp.sum(h3 * wh, axis=0, keepdims=True)              # (1, M)

    # (2,1) average pool: the pair partner of row h is a +W lane shift.
    # Results are valid at even-h lane positions; the wrapper keeps only those.
    buf_ref[0:1, _PAD:_PAD + M] = yfull
    partner = buf_ref[0:1, _PAD + W:_PAD + W + M]
    phase = 0.5 * (yfull + partner) + basis_ref[...]             # (1, M)

    sin_v, cos_v = _sincos(phase)
    phase_ref[0] = phase
    cos_ref[0] = cos_v
    sin_ref[0] = sin_v


@functools.partial(jax.jit, static_argnames=("batch_block",))
def rersm_forward(x_nchw, basis, params, *, batch_block=None):
    """x_nchw: (B, 4, H, W) float32 (NCHW, like the PyTorch module); basis: (H//2, W)."""
    w1, b1, w2, b2, w3, b3, wh, bh = params
    B, Cin, H, W = x_nchw.shape
    assert H % 2 == 0
    C = w1.shape[-1]
    H2 = H // 2
    if batch_block is None:
        batch_block = B                      # fully fused batch: single grid step
    assert B % batch_block == 0
    nb = B // batch_block
    M = batch_block * H * W                  # flattened band length (lane axis)
    f32 = jnp.float32

    # ---- lane-dense activations: (channels, B*H*W), channels padded to C ----
    x = x_nchw.astype(f32)
    if Cin < C:
        x = jnp.pad(x, ((0, 0), (0, C - Cin), (0, 0), (0, 0)))
    x_flat = jnp.transpose(x, (1, 0, 2, 3)).reshape(C, B * H * W)

    # ---- conv weights as (Cout, 9*Cpad) im2col matrices ----
    def conv_w(w):                           # w: (3, 3, cin, cout) HWIO
        cin = w.shape[2]
        if cin < C:
            w = jnp.pad(w, ((0, 0), (0, 0), (0, C - cin), (0, 0)))
        return jnp.transpose(w, (3, 0, 1, 2)).reshape(C, 9 * C).astype(f32)

    w1m, w2m, w3m = conv_w(w1), conv_w(w2), conv_w(w3)

    # ---- pack the small per-channel params into one (C, 4) tile ----
    small = jnp.stack(
        [b1.reshape(C), b2.reshape(C), b3.reshape(C), wh.reshape(C)],
        axis=1).astype(f32)

    # ---- basis expanded to the flat (1, M) layout, head bias folded in ----
    basis_full = jnp.repeat(basis.astype(f32).reshape(H2, W), 2, axis=0)   # (H, W)
    basis_full = jnp.broadcast_to(basis_full[None], (batch_block, H, W)).reshape(1, M)
    basis_full = basis_full + bh.reshape(()).astype(f32)

    # ---- 3x3 tap offsets + image-edge masks in the flat layout ----
    hh = jnp.arange(H)[:, None]
    ww = jnp.arange(W)[None, :]
    offsets, masks = [], []
    for dy in (-1, 0, 1):
        for dx in (-1, 0, 1):
            offsets.append(dy * W + dx)
            m = ((hh + dy >= 0) & (hh + dy < H) & (ww + dx >= 0) & (ww + dx < W))
            masks.append(jnp.broadcast_to(m[None], (batch_block, H, W)).reshape(M))
    mask_arr = jnp.stack(masks, axis=0).astype(f32)                         # (9, M)

    kernel = functools.partial(rersm_kernel, W=W, offsets=tuple(offsets))

    grid_spec = pltpu.PrefetchScalarGridSpec(
        num_scalar_prefetch=0,
        grid=(nb,),
        in_specs=[
            pl.BlockSpec((C, M), lambda i: (0, i)),          # x band
            pl.BlockSpec((C, 9 * C), lambda i: (0, 0)),      # w1 (im2col)
            pl.BlockSpec((C, 9 * C), lambda i: (0, 0)),      # w2
            pl.BlockSpec((C, 9 * C), lambda i: (0, 0)),      # w3
            pl.BlockSpec((C, 4), lambda i: (0, 0)),          # b1|b2|b3|wh
            pl.BlockSpec((1, M), lambda i: (0, 0)),          # basis (+bh)
            pl.BlockSpec((9, M), lambda i: (0, 0)),          # tap masks
        ],
        out_specs=[
            pl.BlockSpec((1, 1, M), lambda i: (i, 0, 0)),    # phase
            pl.BlockSpec((1, 1, M), lambda i: (i, 0, 0)),    # cos(phase)
            pl.BlockSpec((1, 1, M), lambda i: (i, 0, 0)),    # sin(phase)
        ],
        scratch_shapes=[pltpu.VMEM((C, M + 2 * _PAD), f32)],
    )
    out_shape = [jax.ShapeDtypeStruct((nb, 1, M), f32)] * 3

    phase_f, cos_f, sin_f = pl.pallas_call(
        kernel,
        out_shape=out_shape,
        grid_spec=grid_spec,
        compiler_params=pltpu.CompilerParams(
            dimension_semantics=("parallel",)),   # batch bands are independent
    )(x_flat, w1m, w2m, w3m, small, basis_full, mask_arr)

    # Keep the even-h rows (the (2,1)-pooled positions); restore (B, H//2, W).
    def sel(a):
        return a.reshape(B, H, W)[:, 0::2, :]

    phase = sel(phase_f)
    # Pallas has no complex dtype: assemble complex64 from the fused cos/sin planes.
    e_phase = jax.lax.complex(sel(cos_f), sel(sin_f))
    return e_phase, phase


def ref_forward(x_nchw, basis, params):
    """Pure-JAX reference with identical semantics (for correctness check)."""
    w1, b1, w2, b2, w3, b3, wh, bh = params
    x = jnp.transpose(x_nchw, (0, 2, 3, 1)).astype(jnp.float32)

    def conv3x3(inp, w, b):
        Bn, H, W, _ = inp.shape
        xp = jnp.pad(inp, ((0, 0), (1, 1), (1, 1), (0, 0)))
        out = b
        for dy in range(3):
            for dx in range(3):
                out = out + jnp.einsum('bhwc,co->bhwo',
                                       xp[:, dy:dy + H, dx:dx + W, :], w[dy, dx],
                                       precision=jax.lax.Precision.HIGHEST)
        return out

    h1 = jax.nn.relu(conv3x3(x, w1, b1))
    h2 = jax.nn.relu(conv3x3(h1, w2, b2))
    h3 = jax.nn.relu(conv3x3(h2, w3, b3) + h1)
    Bn, H, W, C = h3.shape
    pooled = h3.reshape(Bn, H // 2, 2, W, C).mean(axis=2)
    y = jnp.sum(pooled * wh, axis=-1) + bh
    phase = y + basis
    return jnp.cos(phase) + 1j * jnp.sin(phase), phase


if __name__ == "__main__":
    key = jax.random.PRNGKey(0)
    kx, kb, *kw = jax.random.split(key, 10)

    B, Cin, H, W = 2, 4, 16, 16
    C = C_HID

    # Inputs (NCHW, as in the PyTorch module) and a carrier-phase basis on (h/2, w).
    x = jax.random.normal(kx, (B, Cin, H, W), jnp.float32)
    basis = (2.0 * jnp.pi * jnp.arange(W, dtype=jnp.float32) / W)[None, :] * \
            jnp.ones((H // 2, 1), jnp.float32)
    basis = basis + 0.05 * jax.random.normal(kb, (H // 2, W), jnp.float32)

    # Deterministic synthetic parameters (shapes implied by ResEncoder(4, 1)).
    params = (
        0.1 * jax.random.normal(kw[0], (3, 3, Cin, C), jnp.float32),   # w1
        0.01 * jax.random.normal(kw[1], (1, 1, C), jnp.float32),       # b1
        0.1 * jax.random.normal(kw[2], (3, 3, C, C), jnp.float32),     # w2
        0.01 * jax.random.normal(kw[3], (1, 1, C), jnp.float32),       # b2
        0.1 * jax.random.normal(kw[4], (3, 3, C, C), jnp.float32),     # w3
        0.01 * jax.random.normal(kw[5], (1, 1, C), jnp.float32),       # b3
        0.1 * jax.random.normal(kw[6], (1, 1, C), jnp.float32),        # wh (1x1 head)
        0.01 * jax.random.normal(kw[7], (1, 1), jnp.float32),          # bh
    )

    e_phase, phase = rersm_forward(x, basis, params)
    jax.block_until_ready((e_phase, phase))

    e_ref, p_ref = ref_forward(x, basis, params)
    assert phase.shape == (B, H // 2, W)
    assert e_phase.shape == (B, H // 2, W) and jnp.iscomplexobj(e_phase)
    assert jnp.allclose(phase, p_ref, rtol=1e-3, atol=1e-3), "PhaseMap mismatch vs JAX reference"
    assert jnp.allclose(e_phase, e_ref, rtol=1e-3, atol=1e-3), "e_PhaseMap mismatch vs JAX reference"

    print("KERNEL_OK")
</pallas_src>

<mosaic_0001>
module attributes {stable_mosaic.version = 11 : i64} {
  func.func @rersm_kernel(%arg0: i32, %arg1: memref<8x512xf32, #tpu.memory_space<vmem>>, %arg2: memref<8x72xf32, #tpu.memory_space<vmem>>, %arg3: memref<8x72xf32, #tpu.memory_space<vmem>>, %arg4: memref<8x72xf32, #tpu.memory_space<vmem>>, %arg5: memref<8x4xf32, #tpu.memory_space<vmem>>, %arg6: memref<1x512xf32, #tpu.memory_space<vmem>>, %arg7: memref<9x512xf32, #tpu.memory_space<vmem>>, %arg8: memref<1x1x512xf32, #tpu.memory_space<vmem>>, %arg9: memref<1x1x512xf32, #tpu.memory_space<vmem>>, %arg10: memref<1x1x512xf32, #tpu.memory_space<vmem>>, %arg11: memref<8x768xf32, #tpu.memory_space<vmem>>) attributes {dimension_semantics = [#tpu.dimension_semantics<parallel>], iteration_bounds = array<i64: 1>, scalar_prefetch = 0 : i64, scratch_operands = 1 : i64, tpu.core_type = #tpu.core_type<tc>, window_params = [{transform_indices = @transform_0, window_bounds = array<i64: 8, 512>}, {pipeline_mode = #tpu.pipeline_mode<synchronous>, transform_indices = @transform_1, window_bounds = array<i64: 8, 72>}, {pipeline_mode = #tpu.pipeline_mode<synchronous>, transform_indices = @transform_2, window_bounds = array<i64: 8, 72>}, {pipeline_mode = #tpu.pipeline_mode<synchronous>, transform_indices = @transform_3, window_bounds = array<i64: 8, 72>}, {pipeline_mode = #tpu.pipeline_mode<synchronous>, transform_indices = @transform_4, window_bounds = array<i64: 8, 4>}, {pipeline_mode = #tpu.pipeline_mode<synchronous>, transform_indices = @transform_5, window_bounds = array<i64: 1, 512>}, {pipeline_mode = #tpu.pipeline_mode<synchronous>, transform_indices = @transform_6, window_bounds = array<i64: 9, 512>}, {transform_indices = @transform_7, window_bounds = array<i64: 1, 1, 512>}, {transform_indices = @transform_8, window_bounds = array<i64: 1, 1, 512>}, {transform_indices = @transform_9, window_bounds = array<i64: 1, 1, 512>}]} {
    %cst = arith.constant 0.000000e+00 : f32
    %0 = vector.broadcast %cst : f32 to vector<8x128xf32>
    %c0 = arith.constant 0 : index
    %c0_0 = arith.constant 0 : index
    %1 = vector.load %arg11[%c0, %c0_0] : memref<8x768xf32, #tpu.memory_space<vmem>>, vector<8x128xf32>
    tpu.vector_store %arg11[%c0, %c0_0], %0 {strides = array<i32>} : memref<8x768xf32, #tpu.memory_space<vmem>>, vector<8x128xf32>,
    %c0_1 = arith.constant 0 : index
    %c640 = arith.constant 640 : index
    %2 = vector.load %arg11[%c0_1, %c640] : memref<8x768xf32, #tpu.memory_space<vmem>>, vector<8x128xf32>
    tpu.vector_store %arg11[%c0_1, %c640], %0 {strides = array<i32>} : memref<8x768xf32, #tpu.memory_space<vmem>>, vector<8x128xf32>,
    %c0_2 = arith.constant 0 : index
    %c0_3 = arith.constant 0 : index
    %3 = vector.load %arg5[%c0_2, %c0_3] : memref<8x4xf32, #tpu.memory_space<vmem>>, vector<8x1xf32>
    %c0_4 = arith.constant 0 : index
    %c1 = arith.constant 1 : index
    %4 = vector.load %arg5[%c0_4, %c1] : memref<8x4xf32, #tpu.memory_space<vmem>>, vector<8x1xf32>
    %c0_5 = arith.constant 0 : index
    %c2 = arith.constant 2 : index
    %5 = vector.load %arg5[%c0_5, %c2] : memref<8x4xf32, #tpu.memory_space<vmem>>, vector<8x1xf32>
    %c0_6 = arith.constant 0 : index
    %c3 = arith.constant 3 : index
    %6 = vector.load %arg5[%c0_6, %c3] : memref<8x4xf32, #tpu.memory_space<vmem>>, vector<8x1xf32>
    %c0_7 = arith.constant 0 : index
    %c0_8 = arith.constant 0 : index
    %7 = vector.load %arg1[%c0_7, %c0_8] : memref<8x512xf32, #tpu.memory_space<vmem>>, vector<8x512xf32>
    %c0_9 = arith.constant 0 : index
    %c128 = arith.constant 128 : index
    %8 = vector.load %arg11[%c0_9, %c128] : memref<8x768xf32, #tpu.memory_space<vmem>>, vector<8x512xf32>
    tpu.vector_store %arg11[%c0_9, %c128], %7 {strides = array<i32>} : memref<8x768xf32, #tpu.memory_space<vmem>>, vector<8x512xf32>,
    %c0_10 = arith.constant 0 : index
    %c111 = arith.constant 111 : index
    %9 = vector.load %arg11[%c0_10, %c111] : memref<8x768xf32, #tpu.memory_space<vmem>>, vector<8x512xf32>
    %c0_11 = arith.constant 0 : index
    %c0_12 = arith.constant 0 : index
    %10 = vector.load %arg7[%c0_11, %c0_12] : memref<9x512xf32, #tpu.memory_space<vmem>>, vector<1x512xf32>
    %11 = vector.broadcast %10 : vector<1x512xf32> to vector<8x512xf32>
    %12 = arith.mulf %9, %11 : vector<8x512xf32>
    %c0_13 = arith.constant 0 : index
    %c112 = arith.constant 112 : index
    %13 = vector.load %arg11[%c0_13, %c112] : memref<8x768xf32, #tpu.memory_space<vmem>>, vector<8x512xf32>
    %c1_14 = arith.constant 1 : index
    %c0_15 = arith.constant 0 : index
    %14 = vector.load %arg7[%c1_14, %c0_15] : memref<9x512xf32, #tpu.memory_space<vmem>>, vector<1x512xf32>
    %15 = vector.broadcast %14 : vector<1x512xf32> to vector<8x512xf32>
    %16 = arith.mulf %13, %15 : vector<8x512xf32>
    %c0_16 = arith.constant 0 : index
    %c113 = arith.constant 113 : index
    %17 = vector.load %arg11[%c0_16, %c113] : memref<8x768xf32, #tpu.memory_space<vmem>>, vector<8x512xf32>
    %c2_17 = arith.constant 2 : index
    %c0_18 = arith.constant 0 : index
    %18 = vector.load %arg7[%c2_17, %c0_18] : memref<9x512xf32, #tpu.memory_space<vmem>>, vector<1x512xf32>
    %19 = vector.broadcast %18 : vector<1x512xf32> to vector<8x512xf32>
    %20 = arith.mulf %17, %19 : vector<8x512xf32>
    %c0_19 = arith.constant 0 : index
    %c127 = arith.constant 127 : index
    %21 = vector.load %arg11[%c0_19, %c127] : memref<8x768xf32, #tpu.memory_space<vmem>>, vector<8x512xf32>
    %c3_20 = arith.constant 3 : index
    %c0_21 = arith.constant 0 : index
    %22 = vector.load %arg7[%c3_20, %c0_21] : memref<9x512xf32, #tpu.memory_space<vmem>>, vector<1x512xf32>
    %23 = vector.broadcast %22 : vector<1x512xf32> to vector<8x512xf32>
    %24 = arith.mulf %21, %23 : vector<8x512xf32>
    %c0_22 = arith.constant 0 : index
    %c128_23 = arith.constant 128 : index
    %25 = vector.load %arg11[%c0_22, %c128_23] : memref<8x768xf32, #tpu.memory_space<vmem>>, vector<8x512xf32>
    %c0_24 = arith.constant 0 : index
    %c129 = arith.constant 129 : index
    %26 = vector.load %arg11[%c0_24, %c129] : memref<8x768xf32, #tpu.memory_space<vmem>>, vector<8x512xf32>
    %c5 = arith.constant 5 : index
    %c0_25 = arith.constant 0 : index
    %27 = vector.load %arg7[%c5, %c0_25] : memref<9x512xf32, #tpu.memory_space<vmem>>, vector<1x512xf32>
    %28 = vector.broadcast %27 : vector<1x512xf32> to vector<8x512xf32>
    %29 = arith.mulf %26, %28 : vector<8x512xf32>
    %c0_26 = arith.constant 0 : index
    %c143 = arith.constant 143 : index
    %30 = vector.load %arg11[%c0_26, %c143] : memref<8x768xf32, #tpu.memory_space<vmem>>, vector<8x512xf32>
    %c6 = arith.constant 6 : index
    %c0_27 = arith.constant 0 : index
    %31 = vector.load %arg7[%c6, %c0_27] : memref<9x512xf32, #tpu.memory_space<vmem>>, vector<1x512xf32>
    %32 = vector.broadcast %31 : vector<1x512xf32> to vector<8x512xf32>
    %33 = arith.mulf %30, %32 : vector<8x512xf32>
    %c0_28 = arith.constant 0 : index
    %c144 = arith.constant 144 : index
    %34 = vector.load %arg11[%c0_28, %c144] : memref<8x768xf32, #tpu.memory_space<vmem>>, vector<8x512xf32>
    %c7 = arith.constant 7 : index
    %c0_29 = arith.constant 0 : index
    %35 = vector.load %arg7[%c7, %c0_29] : memref<9x512xf32, #tpu.memory_space<vmem>>, vector<1x512xf32>
    %36 = vector.broadcast %35 : vector<1x512xf32> to vector<8x512xf32>
    %37 = arith.mulf %34, %36 : vector<8x512xf32>
    %c0_30 = arith.constant 0 : index
    %c145 = arith.constant 145 : index
    %38 = vector.load %arg11[%c0_30, %c145] : memref<8x768xf32, #tpu.memory_space<vmem>>, vector<8x512xf32>
    %c8 = arith.constant 8 : index
    %c0_31 = arith.constant 0 : index
    %39 = vector.load %arg7[%c8, %c0_31] : memref<9x512xf32, #tpu.memory_space<vmem>>, vector<1x512xf32>
    %40 = vector.broadcast %39 : vector<1x512xf32> to vector<8x512xf32>
    %41 = arith.mulf %38, %40 : vector<8x512xf32>
    %42 = tpu.concatenate %12, %16, %20, %24, %25, %29, %33, %37, %41 in 0 : vector<8x512xf32>, vector<8x512xf32>, vector<8x512xf32>, vector<8x512xf32>, vector<8x512xf32>, vector<8x512xf32>, vector<8x512xf32>, vector<8x512xf32>, vector<8x512xf32> -> vector<72x512xf32>
    %c0_32 = arith.constant 0 : index
    %c0_33 = arith.constant 0 : index
    %43 = vector.load %arg2[%c0_32, %c0_33] : memref<8x72xf32, #tpu.memory_space<vmem>>, vector<8x72xf32>
    %cst_34 = arith.constant dense<0.000000e+00> : vector<8x512xf32>
    %44 = tpu.matmul %43, %42, %cst_34 {dimension_numbers = #tpu.dot_dimension_numbers<[1], [0], [0], [1], [0, 0, 1, 1], [], []>} : vector<8x72xf32>, vector<72x512xf32>, vector<8x512xf32> -> vector<8x512xf32>
    %45 = vector.broadcast %3 : vector<8x1xf32> to vector<8x512xf32>
    %46 = arith.addf %44, %45 : vector<8x512xf32>
    %cst_35 = arith.constant 0.000000e+00 : f32
    %47 = vector.broadcast %cst_35 : f32 to vector<8x512xf32>
    %48 = arith.maximumf %46, %47 : vector<8x512xf32>
    %c0_36 = arith.constant 0 : index
    %c128_37 = arith.constant 128 : index
    %49 = vector.load %arg11[%c0_36, %c128_37] : memref<8x768xf32, #tpu.memory_space<vmem>>, vector<8x512xf32>
    tpu.vector_store %arg11[%c0_36, %c128_37], %48 {strides = array<i32>} : memref<8x768xf32, #tpu.memory_space<vmem>>, vector<8x512xf32>,
    %c0_38 = arith.constant 0 : index
    %c111_39 = arith.constant 111 : index
    %50 = vector.load %arg11[%c0_38, %c111_39] : memref<8x768xf32, #tpu.memory_space<vmem>>, vector<8x512xf32>
    %c0_40 = arith.constant 0 : index
    %c0_41 = arith.constant 0 : index
    %51 = vector.load %arg7[%c0_40, %c0_41] : memref<9x512xf32, #tpu.memory_space<vmem>>, vector<1x512xf32>
    %52 = vector.broadcast %51 : vector<1x512xf32> to vector<8x512xf32>
    %53 = arith.mulf %50, %52 : vector<8x512xf32>
    %c0_42 = arith.constant 0 : index
    %c112_43 = arith.constant 112 : index
    %54 = vector.load %arg11[%c0_42, %c112_43] : memref<8x768xf32, #tpu.memory_space<vmem>>, vector<8x512xf32>
    %c1_44 = arith.constant 1 : index
    %c0_45 = arith.constant 0 : index
    %55 = vector.load %arg7[%c1_44, %c0_45] : memref<9x512xf32, #tpu.memory_space<vmem>>, vector<1x512xf32>
    %56 = vector.broadcast %55 : vector<1x512xf32> to vector<8x512xf32>
    %57 = arith.mulf %54, %56 : vector<8x512xf32>
    %c0_46 = arith.constant 0 : index
    %c113_47 = arith.constant 113 : index
    %58 = vector.load %arg11[%c0_46, %c113_47] : memref<8x768xf32, #tpu.memory_space<vmem>>, vector<8x512xf32>
    %c2_48 = arith.constant 2 : index
    %c0_49 = arith.constant 0 : index
    %59 = vector.load %arg7[%c2_48, %c0_49] : memref<9x512xf32, #tpu.memory_space<vmem>>, vector<1x512xf32>
    %60 = vector.broadcast %59 : vector<1x512xf32> to vector<8x512xf32>
    %61 = arith.mulf %58, %60 : vector<8x512xf32>
    %c0_50 = arith.constant 0 : index
    %c127_51 = arith.constant 127 : index
    %62 = vector.load %arg11[%c0_50, %c127_51] : memref<8x768xf32, #tpu.memory_space<vmem>>, vector<8x512xf32>
    %c3_52 = arith.constant 3 : index
    %c0_53 = arith.constant 0 : index
    %63 = vector.load %arg7[%c3_52, %c0_53] : memref<9x512xf32, #tpu.memory_space<vmem>>, vector<1x512xf32>
    %64 = vector.broadcast %63 : vector<1x512xf32> to vector<8x512xf32>
    %65 = arith.mulf %62, %64 : vector<8x512xf32>
    %c0_54 = arith.constant 0 : index
    %c128_55 = arith.constant 128 : index
    %66 = vector.load %arg11[%c0_54, %c128_55] : memref<8x768xf32, #tpu.memory_space<vmem>>, vector<8x512xf32>
    %c0_56 = arith.constant 0 : index
    %c129_57 = arith.constant 129 : index
    %67 = vector.load %arg11[%c0_56, %c129_57] : memref<8x768xf32, #tpu.memory_space<vmem>>, vector<8x512xf32>
    %c5_58 = arith.constant 5 : index
    %c0_59 = arith.constant 0 : index
    %68 = vector.load %arg7[%c5_58, %c0_59] : memref<9x512xf32, #tpu.memory_space<vmem>>, vector<1x512xf32>
    %69 = vector.broadcast %68 : vector<1x512xf32> to vector<8x512xf32>
    %70 = arith.mulf %67, %69 : vector<8x512xf32>
    %c0_60 = arith.constant 0 : index
    %c143_61 = arith.constant 143 : index
    %71 = vector.load %arg11[%c0_60, %c143_61] : memref<8x768xf32, #tpu.memory_space<vmem>>, vector<8x512xf32>
    %c6_62 = arith.constant 6 : index
    %c0_63 = arith.constant 0 : index
    %72 = vector.load %arg7[%c6_62, %c0_63] : memref<9x512xf32, #tpu.memory_space<vmem>>, vector<1x512xf32>
    %73 = vector.broadcast %72 : vector<1x512xf32> to vector<8x512xf32>
    %74 = arith.mulf %71, %73 : vector<8x512xf32>
    %c0_64 = arith.constant 0 : index
    %c144_65 = arith.constant 144 : index
    %75 = vector.load %arg11[%c0_64, %c144_65] : memref<8x768xf32, #tpu.memory_space<vmem>>, vector<8x512xf32>
    %c7_66 = arith.constant 7 : index
    %c0_67 = arith.constant 0 : index
    %76 = vector.load %arg7[%c7_66, %c0_67] : memref<9x512xf32, #tpu.memory_space<vmem>>, vector<1x512xf32>
    %77 = vector.broadcast %76 : vector<1x512xf32> to vector<8x512xf32>
    %78 = arith.mulf %75, %77 : vector<8x512xf32>
    %c0_68 = arith.constant 0 : index
    %c145_69 = arith.constant 145 : index
    %79 = vector.load %arg11[%c0_68, %c145_69] : memref<8x768xf32, #tpu.memory_space<vmem>>, vector<8x512xf32>
    %c8_70 = arith.constant 8 : index
    %c0_71 = arith.constant 0 : index
    %80 = vector.load %arg7[%c8_70, %c0_71] : memref<9x512xf32, #tpu.memory_space<vmem>>, vector<1x512xf32>
    %81 = vector.broadcast %80 : vector<1x512xf32> to vector<8x512xf32>
    %82 = arith.mulf %79, %81 : vector<8x512xf32>
    %83 = tpu.concatenate %53, %57, %61, %65, %66, %70, %74, %78, %82 in 0 : vector<8x512xf32>, vector<8x512xf32>, vector<8x512xf32>, vector<8x512xf32>, vector<8x512xf32>, vector<8x512xf32>, vector<8x512xf32>, vector<8x512xf32>, vector<8x512xf32> -> vector<72x512xf32>
    %c0_72 = arith.constant 0 : index
    %c0_73 = arith.constant 0 : index
    %84 = vector.load %arg3[%c0_72, %c0_73] : memref<8x72xf32, #tpu.memory_space<vmem>>, vector<8x72xf32>
    %cst_74 = arith.constant dense<0.000000e+00> : vector<8x512xf32>
    %85 = tpu.matmul %84, %83, %cst_74 {dimension_numbers = #tpu.dot_dimension_numbers<[1], [0], [0], [1], [0, 0, 1, 1], [], []>} : vector<8x72xf32>, vector<72x512xf32>, vector<8x512xf32> -> vector<8x512xf32>
    %86 = vector.broadcast %4 : vector<8x1xf32> to vector<8x512xf32>
    %87 = arith.addf %85, %86 : vector<8x512xf32>
    %cst_75 = arith.constant 0.000000e+00 : f32
    %88 = vector.broadcast %cst_75 : f32 to vector<8x512xf32>
    %89 = arith.maximumf %87, %88 : vector<8x512xf32>
    %c0_76 = arith.constant 0 : index
    %c128_77 = arith.constant 128 : index
    %90 = vector.load %arg11[%c0_76, %c128_77] : memref<8x768xf32, #tpu.memory_space<vmem>>, vector<8x512xf32>
    tpu.vector_store %arg11[%c0_76, %c128_77], %89 {strides = array<i32>} : memref<8x768xf32, #tpu.memory_space<vmem>>, vector<8x512xf32>,
    %c0_78 = arith.constant 0 : index
    %c111_79 = arith.constant 111 : index
    %91 = vector.load %arg11[%c0_78, %c111_79] : memref<8x768xf32, #tpu.memory_space<vmem>>, vector<8x512xf32>
    %c0_80 = arith.constant 0 : index
    %c0_81 = arith.constant 0 : index
    %92 = vector.load %arg7[%c0_80, %c0_81] : memref<9x512xf32, #tpu.memory_space<vmem>>, vector<1x512xf32>
    %93 = vector.broadcast %92 : vector<1x512xf32> to vector<8x512xf32>
    %94 = arith.mulf %91, %93 : vector<8x512xf32>
    %c0_82 = arith.constant 0 : index
    %c112_83 = arith.constant 112 : index
    %95 = vector.load %arg11[%c0_82, %c112_83] : memref<8x768xf32, #tpu.memory_space<vmem>>, vector<8x512xf32>
    %c1_84 = arith.constant 1 : index
    %c0_85 = arith.constant 0 : index
    %96 = vector.load %arg7[%c1_84, %c0_85] : memref<9x512xf32, #tpu.memory_space<vmem>>, vector<1x512xf32>
    %97 = vector.broadcast %96 : vector<1x512xf32> to vector<8x512xf32>
    %98 = arith.mulf %95, %97 : vector<8x512xf32>
    %c0_86 = arith.constant 0 : index
    %c113_87 = arith.constant 113 : index
    %99 = vector.load %arg11[%c0_86, %c113_87] : memref<8x768xf32, #tpu.memory_space<vmem>>, vector<8x512xf32>
    %c2_88 = arith.constant 2 : index
    %c0_89 = arith.constant 0 : index
    %100 = vector.load %arg7[%c2_88, %c0_89] : memref<9x512xf32, #tpu.memory_space<vmem>>, vector<1x512xf32>
    %101 = vector.broadcast %100 : vector<1x512xf32> to vector<8x512xf32>
    %102 = arith.mulf %99, %101 : vector<8x512xf32>
    %c0_90 = arith.constant 0 : index
    %c127_91 = arith.constant 127 : index
    %103 = vector.load %arg11[%c0_90, %c127_91] : memref<8x768xf32, #tpu.memory_space<vmem>>, vector<8x512xf32>
    %c3_92 = arith.constant 3 : index
    %c0_93 = arith.constant 0 : index
    %104 = vector.load %arg7[%c3_92, %c0_93] : memref<9x512xf32, #tpu.memory_space<vmem>>, vector<1x512xf32>
    %105 = vector.broadcast %104 : vector<1x512xf32> to vector<8x512xf32>
    %106 = arith.mulf %103, %105 : vector<8x512xf32>
    %c0_94 = arith.constant 0 : index
    %c128_95 = arith.constant 128 : index
    %107 = vector.load %arg11[%c0_94, %c128_95] : memref<8x768xf32, #tpu.memory_space<vmem>>, vector<8x512xf32>
    %c0_96 = arith.constant 0 : index
    %c129_97 = arith.constant 129 : index
    %108 = vector.load %arg11[%c0_96, %c129_97] : memref<8x768xf32, #tpu.memory_space<vmem>>, vector<8x512xf32>
    %c5_98 = arith.constant 5 : index
    %c0_99 = arith.constant 0 : index
    %109 = vector.load %arg7[%c5_98, %c0_99] : memref<9x512xf32, #tpu.memory_space<vmem>>, vector<1x512xf32>
    %110 = vector.broadcast %109 : vector<1x512xf32> to vector<8x512xf32>
    %111 = arith.mulf %108, %110 : vector<8x512xf32>
    %c0_100 = arith.constant 0 : index
    %c143_101 = arith.constant 143 : index
    %112 = vector.load %arg11[%c0_100, %c143_101] : memref<8x768xf32, #tpu.memory_space<vmem>>, vector<8x512xf32>
    %c6_102 = arith.constant 6 : index
    %c0_103 = arith.constant 0 : index
    %113 = vector.load %arg7[%c6_102, %c0_103] : memref<9x512xf32, #tpu.memory_space<vmem>>, vector<1x512xf32>
    %114 = vector.broadcast %113 : vector<1x512xf32> to vector<8x512xf32>
    %115 = arith.mulf %112, %114 : vector<8x512xf32>
    %c0_104 = arith.constant 0 : index
    %c144_105 = arith.constant 144 : index
    %116 = vector.load %arg11[%c0_104, %c144_105] : memref<8x768xf32, #tpu.memory_space<vmem>>, vector<8x512xf32>
    %c7_106 = arith.constant 7 : index
    %c0_107 = arith.constant 0 : index
    %117 = vector.load %arg7[%c7_106, %c0_107] : memref<9x512xf32, #tpu.memory_space<vmem>>, vector<1x512xf32>
    %118 = vector.broadcast %117 : vector<1x512xf32> to vector<8x512xf32>
    %119 = arith.mulf %116, %118 : vector<8x512xf32>
    %c0_108 = arith.constant 0 : index
    %c145_109 = arith.constant 145 : index
    %120 = vector.load %arg11[%c0_108, %c145_109] : memref<8x768xf32, #tpu.memory_space<vmem>>, vector<8x512xf32>
    %c8_110 = arith.constant 8 : index
    %c0_111 = arith.constant 0 : index
    %121 = vector.load %arg7[%c8_110, %c0_111] : memref<9x512xf32, #tpu.memory_space<vmem>>, vector<1x512xf32>
    %122 = vector.broadcast %121 : vector<1x512xf32> to vector<8x512xf32>
    %123 = arith.mulf %120, %122 : vector<8x512xf32>
    %124 = tpu.concatenate %94, %98, %102, %106, %107, %111, %115, %119, %123 in 0 : vector<8x512xf32>, vector<8x512xf32>, vector<8x512xf32>, vector<8x512xf32>, vector<8x512xf32>, vector<8x512xf32>, vector<8x512xf32>, vector<8x512xf32>, vector<8x512xf32> -> vector<72x512xf32>
    %c0_112 = arith.constant 0 : index
    %c0_113 = arith.constant 0 : index
    %125 = vector.load %arg4[%c0_112, %c0_113] : memref<8x72xf32, #tpu.memory_space<vmem>>, vector<8x72xf32>
    %cst_114 = arith.constant dense<0.000000e+00> : vector<8x512xf32>
    %126 = tpu.matmul %125, %124, %cst_114 {dimension_numbers = #tpu.dot_dimension_numbers<[1], [0], [0], [1], [0, 0, 1, 1], [], []>} : vector<8x72xf32>, vector<72x512xf32>, vector<8x512xf32> -> vector<8x512xf32>
    %127 = vector.broadcast %5 : vector<8x1xf32> to vector<8x512xf32>
    %128 = arith.addf %126, %127 : vector<8x512xf32>
    %129 = arith.addf %128, %48 : vector<8x512xf32>
    %cst_115 = arith.constant 0.000000e+00 : f32
    %130 = vector.broadcast %cst_115 : f32 to vector<8x512xf32>
    %131 = arith.maximumf %129, %130 : vector<8x512xf32>
    %132 = vector.broadcast %6 : vector<8x1xf32> to vector<8x512xf32>
    %133 = arith.mulf %131, %132 : vector<8x512xf32>
    %cst_116 = arith.constant dense<0.000000e+00> : vector<512xf32>
    %134 = vector.multi_reduction <add>, %133, %cst_116 [0] : vector<8x512xf32> to vector<512xf32>
    %135 = vector.shape_cast %134 : vector<512xf32> to vector<1x512xf32>
    %c0_117 = arith.constant 0 : index
    %c128_118 = arith.constant 128 : index
    %136 = vector.load %arg11[%c0_117, %c128_118] : memref<8x768xf32, #tpu.memory_space<vmem>>, vector<1x512xf32>
    tpu.vector_store %arg11[%c0_117, %c128_118], %135 {strides = array<i32>} : memref<8x768xf32, #tpu.memory_space<vmem>>, vector<1x512xf32>,
    %c0_119 = arith.constant 0 : index
    %c144_120 = arith.constant 144 : index
    %137 = vector.load %arg11[%c0_119, %c144_120] : memref<8x768xf32, #tpu.memory_space<vmem>>, vector<1x512xf32>
    %138 = arith.addf %135, %137 : vector<1x512xf32>
    %cst_121 = arith.constant 5.000000e-01 : f32
    %139 = vector.broadcast %cst_121 : f32 to vector<1x512xf32>
    %140 = arith.mulf %139, %138 : vector<1x512xf32>
    %c0_122 = arith.constant 0 : index
    %c0_123 = arith.constant 0 : index
    %141 = vector.load %arg6[%c0_122, %c0_123] : memref<1x512xf32, #tpu.memory_space<vmem>>, vector<1x512xf32>
    %142 = arith.addf %140, %141 : vector<1x512xf32>
    %cst_124 = arith.constant 0.318309873 : f32
    %143 = vector.broadcast %cst_124 : f32 to vector<1x512xf32>
    %144 = arith.mulf %142, %143 : vector<1x512xf32>
    %cst_125 = arith.constant 5.000000e-01 : f32
    %145 = vector.broadcast %cst_125 : f32 to vector<1x512xf32>
    %146 = arith.addf %144, %145 : vector<1x512xf32>
    %147 = math.floor %146 : vector<1x512xf32>
    %cst_126 = arith.constant 3.14159274 : f32
    %148 = vector.broadcast %cst_126 : f32 to vector<1x512xf32>
    %149 = arith.mulf %147, %148 : vector<1x512xf32>
    %150 = arith.subf %142, %149 : vector<1x512xf32>
    %cst_127 = arith.constant 5.000000e-01 : f32
    %151 = vector.broadcast %cst_127 : f32 to vector<1x512xf32>
    %152 = arith.mulf %151, %147 : vector<1x512xf32>
    %153 = math.floor %152 : vector<1x512xf32>
    %cst_128 = arith.constant 2.000000e+00 : f32
    %154 = vector.broadcast %cst_128 : f32 to vector<1x512xf32>
    %155 = arith.mulf %154, %153 : vector<1x512xf32>
    %156 = arith.subf %147, %155 : vector<1x512xf32>
    %cst_129 = arith.constant 2.000000e+00 : f32
    %157 = vector.broadcast %cst_129 : f32 to vector<1x512xf32>
    %158 = arith.mulf %157, %156 : vector<1x512xf32>
    %cst_130 = arith.constant 1.000000e+00 : f32
    %159 = vector.broadcast %cst_130 : f32 to vector<1x512xf32>
    %160 = arith.subf %159, %158 : vector<1x512xf32>
    %161 = arith.mulf %150, %150 : vector<1x512xf32>
    %cst_131 = arith.constant -2.50521079E-8 : f32
    %162 = vector.broadcast %cst_131 : f32 to vector<1x512xf32>
    %163 = arith.mulf %161, %162 : vector<1x512xf32>
    %cst_132 = arith.constant 2.75573188E-6 : f32
    %164 = vector.broadcast %cst_132 : f32 to vector<1x512xf32>
    %165 = arith.addf %164, %163 : vector<1x512xf32>
    %166 = arith.mulf %161, %165 : vector<1x512xf32>
    %cst_133 = arith.constant -1.98412701E-4 : f32
    %167 = vector.broadcast %cst_133 : f32 to vector<1x512xf32>
    %168 = arith.addf %167, %166 : vector<1x512xf32>
    %169 = arith.mulf %161, %168 : vector<1x512xf32>
    %cst_134 = arith.constant 0.00833333377 : f32
    %170 = vector.broadcast %cst_134 : f32 to vector<1x512xf32>
    %171 = arith.addf %170, %169 : vector<1x512xf32>
    %172 = arith.mulf %161, %171 : vector<1x512xf32>
    %cst_135 = arith.constant -0.166666672 : f32
    %173 = vector.broadcast %cst_135 : f32 to vector<1x512xf32>
    %174 = arith.addf %173, %172 : vector<1x512xf32>
    %175 = arith.mulf %161, %174 : vector<1x512xf32>
    %cst_136 = arith.constant 1.000000e+00 : f32
    %176 = vector.broadcast %cst_136 : f32 to vector<1x512xf32>
    %177 = arith.addf %176, %175 : vector<1x512xf32>
    %cst_137 = arith.constant -2.755732E-7 : f32
    %178 = vector.broadcast %cst_137 : f32 to vector<1x512xf32>
    %179 = arith.mulf %161, %178 : vector<1x512xf32>
    %cst_138 = arith.constant 2.48015876E-5 : f32
    %180 = vector.broadcast %cst_138 : f32 to vector<1x512xf32>
    %181 = arith.addf %180, %179 : vector<1x512xf32>
    %182 = arith.mulf %161, %181 : vector<1x512xf32>
    %cst_139 = arith.constant -0.00138888892 : f32
    %183 = vector.broadcast %cst_139 : f32 to vector<1x512xf32>
    %184 = arith.addf %183, %182 : vector<1x512xf32>
    %185 = arith.mulf %161, %184 : vector<1x512xf32>
    %cst_140 = arith.constant 0.0416666679 : f32
    %186 = vector.broadcast %cst_140 : f32 to vector<1x512xf32>
    %187 = arith.addf %186, %185 : vector<1x512xf32>
    %188 = arith.mulf %161, %187 : vector<1x512xf32>
    %cst_141 = arith.constant -5.000000e-01 : f32
    %189 = vector.broadcast %cst_141 : f32 to vector<1x512xf32>
    %190 = arith.addf %189, %188 : vector<1x512xf32>
    %191 = arith.mulf %161, %190 : vector<1x512xf32>
    %cst_142 = arith.constant 1.000000e+00 : f32
    %192 = vector.broadcast %cst_142 : f32 to vector<1x512xf32>
    %193 = arith.addf %192, %191 : vector<1x512xf32>
    %194 = arith.mulf %150, %177 : vector<1x512xf32>
    %195 = arith.mulf %160, %194 : vector<1x512xf32>
    %196 = arith.mulf %160, %193 : vector<1x512xf32>
    %c0_143 = arith.constant 0 : index
    %c0_144 = arith.constant 0 : index
    %c0_145 = arith.constant 0 : index
    %197 = vector.load %arg8[%c0_143, %c0_144, %c0_145] : memref<1x1x512xf32, #tpu.memory_space<vmem>>, vector<1x1x512xf32>
    %198 = vector.shape_cast %197 : vector<1x1x512xf32> to vector<1x512xf32>
    %199 = vector.shape_cast %142 : vector<1x512xf32> to vector<1x1x512xf32>
    tpu.vector_store %arg8[%c0_143, %c0_144, %c0_145], %199 {strides = array<i32>} : memref<1x1x512xf32, #tpu.memory_space<vmem>>, vector<1x1x512xf32>,
    %c0_146 = arith.constant 0 : index
    %c0_147 = arith.constant 0 : index
    %c0_148 = arith.constant 0 : index
    %200 = vector.load %arg9[%c0_146, %c0_147, %c0_148] : memref<1x1x512xf32, #tpu.memory_space<vmem>>, vector<1x1x512xf32>
    %201 = vector.shape_cast %200 : vector<1x1x512xf32> to vector<1x512xf32>
    %202 = vector.shape_cast %196 : vector<1x512xf32> to vector<1x1x512xf32>
    tpu.vector_store %arg9[%c0_146, %c0_147, %c0_148], %202 {strides = array<i32>} : memref<1x1x512xf32, #tpu.memory_space<vmem>>, vector<1x1x512xf32>,
    %c0_149 = arith.constant 0 : index
    %c0_150 = arith.constant 0 : index
    %c0_151 = arith.constant 0 : index
    %203 = vector.load %arg10[%c0_149, %c0_150, %c0_151] : memref<1x1x512xf32, #tpu.memory_space<vmem>>, vector<1x1x512xf32>
    %204 = vector.shape_cast %203 : vector<1x1x512xf32> to vector<1x512xf32>
    %205 = vector.shape_cast %195 : vector<1x512xf32> to vector<1x1x512xf32>
    tpu.vector_store %arg10[%c0_149, %c0_150, %c0_151], %205 {strides = array<i32>} : memref<1x1x512xf32, #tpu.memory_space<vmem>>, vector<1x1x512xf32>,
    return
  }
  func.func @transform_0(%arg0: i32) -> (i32, i32) {
    %c0_i32 = arith.constant 0 : i32
    %c0_i32_0 = arith.constant 0 : i32
    return %c0_i32, %arg0 : i32, i32
  }
  func.func @transform_1(%arg0: i32) -> (i32, i32) {
    %c0_i32 = arith.constant 0 : i32
    %c0_i32_0 = arith.constant 0 : i32
    %c0_i32_1 = arith.constant 0 : i32
    return %c0_i32, %c0_i32_0 : i32, i32
  }
  func.func @transform_2(%arg0: i32) -> (i32, i32) {
    %c0_i32 = arith.constant 0 : i32
    %c0_i32_0 = arith.constant 0 : i32
    %c0_i32_1 = arith.constant 0 : i32
    return %c0_i32, %c0_i32_0 : i32, i32
  }
  func.func @transform_3(%arg0: i32) -> (i32, i32) {
    %c0_i32 = arith.constant 0 : i32
    %c0_i32_0 = arith.constant 0 : i32
    %c0_i32_1 = arith.constant 0 : i32
    return %c0_i32, %c0_i32_0 : i32, i32
  }
  func.func @transform_4(%arg0: i32) -> (i32, i32) {
    %c0_i32 = arith.constant 0 : i32
    %c0_i32_0 = arith.constant 0 : i32
    %c0_i32_1 = arith.constant 0 : i32
    return %c0_i32, %c0_i32_0 : i32, i32
  }
  func.func @transform_5(%arg0: i32) -> (i32, i32) {
    %c0_i32 = arith.constant 0 : i32
    %c0_i32_0 = arith.constant 0 : i32
    %c0_i32_1 = arith.constant 0 : i32
    return %c0_i32, %c0_i32_0 : i32, i32
  }
  func.func @transform_6(%arg0: i32) -> (i32, i32) {
    %c0_i32 = arith.constant 0 : i32
    %c0_i32_0 = arith.constant 0 : i32
    %c0_i32_1 = arith.constant 0 : i32
    return %c0_i32, %c0_i32_0 : i32, i32
  }
  func.func @transform_7(%arg0: i32) -> (i32, i32, i32) {
    %c0_i32 = arith.constant 0 : i32
    %c0_i32_0 = arith.constant 0 : i32
    %c0_i32_1 = arith.constant 0 : i32
    return %arg0, %c0_i32, %c0_i32_0 : i32, i32, i32
  }
  func.func @transform_8(%arg0: i32) -> (i32, i32, i32) {
    %c0_i32 = arith.constant 0 : i32
    %c0_i32_0 = arith.constant 0 : i32
    %c0_i32_1 = arith.constant 0 : i32
    return %arg0, %c0_i32, %c0_i32_0 : i32, i32, i32
  }
  func.func @transform_9(%arg0: i32) -> (i32, i32, i32) {
    %c0_i32 = arith.constant 0 : i32
    %c0_i32_0 = arith.constant 0 : i32
    %c0_i32_1 = arith.constant 0 : i32
    return %arg0, %c0_i32, %c0_i32_0 : i32, i32, i32
  }
}

</mosaic_0001>

<llo_original>
// kernel: custom-call
$region0: #{custom-call}
  %s0 = inlined_call_operand.vmem [shape: f32[2,8,16], index: 0, kind: input, shape index: {}]
  %s1 = inlined_call_operand.vmem [shape: f32[2,8,16], index: 1, kind: input, shape index: {}]
  %s2 = inlined_call_operand.hbm [shape: c64[2,8,16], index: 2, kind: output, shape index: {}]
  %s3 = scalar_lea.hbm %s2, 256
  $region1: #{custom-call} parent=0
    #allocation0 [shape = 's32[1]{0}', space=sflag, size = 0x4, scoped, tag = 'scoped memory for custom-call']
    %4 = vsyncpa [#allocation0], 0
    %s5 = sshll.u32 %s0, 4
    %s6 = int_to_ptr.vmem [resolvable:$true] %s5
    %8 = dma.vmem_to_hbm [thread:$0]  %s6, 256, %s2, [#allocation0]
    %9 = dma.done [#allocation0], 256
    %10 = vsyncpa [#allocation0], 1
  $region2: #{custom-call} parent=0
    #allocation1 [shape = 's32[1]{0}', space=sflag, size = 0x4, scoped, tag = 'scoped memory for custom-call']
    %11 = vsyncpa [#allocation1], 0
    %s12 = sshll.u32 %s1, 4
    %s13 = int_to_ptr.vmem [resolvable:$true] %s12
    %15 = dma.vmem_to_hbm [thread:$0]  %s13, 256, %s3, [#allocation1]
    %16 = dma.done [#allocation1], 256
    %17 = vsyncpa [#allocation1], 1

// kernel: rersm_forward.1
$region0: #{rersm_forward.1}
  #allocation0 [shape = 'u32[]', space=smem, size = 0x4, offset = 0x4, fixed_abs, tag = 'smem constant byte address 0x4 - core index']
  #allocation1 [shape = 'u32[144,128]{1,0:T(1,128)}', space=vmem, size = 0x12000, scoped, tag = 'internal scratch']
  #allocation2 [shape = 'f32[8,768]{1,0:T(8,128)}', space=vmem, size = 0x6000, scoped, tag = 'scratch operand']
  %s0 = inlined_call_operand.vmem [shape: f32[8,512], index: 0, kind: input, shape index: {}]
  %s1 = inlined_call_operand.vmem [shape: f32[8,72], index: 1, kind: input, shape index: {}]
  %s2 = inlined_call_operand.vmem [shape: f32[8,72], index: 2, kind: input, shape index: {}]
  %s3 = inlined_call_operand.vmem [shape: f32[8,72], index: 3, kind: input, shape index: {}]
  %s4 = inlined_call_operand.vmem [shape: f32[8,4], index: 4, kind: input, shape index: {}]
  %s5 = inlined_call_operand.vmem [shape: f32[1,512], index: 5, kind: input, shape index: {}]
  %s6 = inlined_call_operand.vmem [shape: f32[9,512], index: 6, kind: input, shape index: {}]
  %s7 = inlined_call_operand.vmem [shape: f32[1,1,512], index: 7, kind: output, shape index: {0}]
  %s8 = inlined_call_operand.vmem [shape: f32[1,1,512], index: 8, kind: output, shape index: {1}]
  %s9 = inlined_call_operand.vmem [shape: f32[1,1,512], index: 9, kind: output, shape index: {2}]
  %10 = xla_tuple %s7, %s8, %s9
  %s11 = sld [smem:[#allocation0]]
  $region54: #{rersm_forward.1} parent=0
    _
  %s13 = ssub.s32 1, %s11
  %s14 = scalar_select 0, %s13, %s11
  // Predicated region
  $region2: #{rersm_forward.1} parent=0 // pred_check
    _
  $region3: #{rersm_forward.1} parent=0 // pred_check_branch
    %16 = sbr.rel (0) target = $region5
  $region4: #{rersm_forward.1} parent=0 // pred_region
    _
  $region5: #{rersm_forward.1} parent=0 // pred_fallthru
    _
  // Predicated region
  $region6: #{rersm_forward.1} parent=0 // pred_check
    _
  $region7: #{rersm_forward.1} parent=0 // pred_check_branch
    %18 = sbr.rel (0) target = $region9
  $region8: #{rersm_forward.1} parent=0 // pred_region
    _
  $region9: #{rersm_forward.1} parent=0 // pred_fallthru
    _
  // Predicated region
  $region10: #{rersm_forward.1} parent=0 // pred_check
    _
  $region11: #{rersm_forward.1} parent=0 // pred_check_branch
    %20 = sbr.rel (0) target = $region13
  $region12: #{rersm_forward.1} parent=0 // pred_region
    _
  $region13: #{rersm_forward.1} parent=0 // pred_fallthru
    _
  // Predicated region
  $region14: #{rersm_forward.1} parent=0 // pred_check
    _
  $region15: #{rersm_forward.1} parent=0 // pred_check_branch
    %22 = sbr.rel (0) target = $region17
  $region16: #{rersm_forward.1} parent=0 // pred_region
    _
  $region17: #{rersm_forward.1} parent=0 // pred_fallthru
    _
  // Predicated region
  $region18: #{rersm_forward.1} parent=0 // pred_check
    _
  $region19: #{rersm_forward.1} parent=0 // pred_check_branch
    %24 = sbr.rel (0) target = $region21
  $region20: #{rersm_forward.1} parent=0 // pred_region
    _
  $region21: #{rersm_forward.1} parent=0 // pred_fallthru
    _
  // Predicated region
  $region22: #{rersm_forward.1} parent=0 // pred_check
    _
  $region23: #{rersm_forward.1} parent=0 // pred_check_branch
    %26 = sbr.rel (0) target = $region25
  $region24: #{rersm_forward.1} parent=0 // pred_region
    _
  $region25: #{rersm_forward.1} parent=0 // pred_fallthru
    _
  // Predicated region
  $region26: #{rersm_forward.1} parent=0 // pred_check
    _
  $region27: #{rersm_forward.1} parent=0 // pred_check_branch
    %28 = sbr.rel (0) target = $region29
  $region28: #{rersm_forward.1} parent=0 // pred_region
    _
  $region29: #{rersm_forward.1} parent=0 // pred_fallthru
    _
  %29 = vst [vmem:[#allocation2] sm:$0xff] 0.0
  %30 = vst [vmem:[#allocation2 + $0x28] sm:$0xff] 0.0
  %v31 = vld [vmem:[%s4] sm:$0xff]
  %v32 = vld [vmem:[%s0] sm:$0xff]
  %v33 = vld [vmem:[%s0 + $0x8] sm:$0xff]
  %v34 = vld [vmem:[%s0 + $0x10] sm:$0xff]
  %v35 = vld [vmem:[%s0 + $0x18] sm:$0xff]
  %36 = vst [vmem:[#allocation2 + $0x8] sm:$0xff] %v32
  %37 = vst [vmem:[#allocation2 + $0x10] sm:$0xff] %v33
  %38 = vst [vmem:[#allocation2 + $0x18] sm:$0xff] %v34
  %39 = vst [vmem:[#allocation2 + $0x20] sm:$0xff] %v35
  %v40 = vld [vmem:[#allocation2] sm:$0xff]
  %v41 = vld [vmem:[#allocation2 + $0x8] sm:$0xff]
  %v42 = vld [vmem:[#allocation2 + $0x10] sm:$0xff]
  %v43 = vld [vmem:[#allocation2 + $0x18] sm:$0xff]
  %v44 = vld [vmem:[#allocation2 + $0x20] sm:$0xff]
  %v45 = vld [vmem:[%s6] ss:$8 sm:$0xf]
  %v47 = vlaneseq
  %v48 = vshrl.u32 %v47, 7
  %v49 = vsub.s32 0, %v48
  %v50 = vrot.slane %v45, %v49
  %v51 = vlaneseq
  %v52 = vshrl.u32 %v51, 7
  %v53 = vsub.s32 1, %v52
  %v54 = vrot.slane %v45, %v53
  %v55 = vlaneseq
  %v56 = vshrl.u32 %v55, 7
  %v57 = vsub.s32 2, %v56
  %v58 = vrot.slane %v45, %v57
  %v59 = vlaneseq
  %v60 = vshrl.u32 %v59, 7
  %v61 = vsub.s32 3, %v60
  %v62 = vrot.slane %v45, %v61
  %63 = vrot.lane.b32.xlu0 %v50, 111
  %v64 = vpop.permute.xlu0 %63
  %65 = vrot.lane.b32.xlu0 %v54, 111
  %v66 = vpop.permute.xlu0 %65
  %67 = vrot.lane.b32.xlu0 %v58, 111
  %v68 = vpop.permute.xlu0 %67
  %69 = vrot.lane.b32.xlu0 %v62, 111
  %v70 = vpop.permute.xlu0 %69
  %vm71 = vcmask 908288
  %v72 = vsel %vm71, %v64, %v66
  %v73 = vsel %vm71, %v66, %v68
  %v74 = vsel %vm71, %v68, %v70
  %v80 = vmul.f32 %v40, %v64
  %v81 = vmul.f32 %v41, %v72
  %v82 = vmul.f32 %v42, %v73
  %v83 = vmul.f32 %v43, %v74
  %v84 = vmul.f32 %v44, %v70
  %s85 = scalar_lea.vmem %s6, 1
  %v86 = vld [vmem:[%s85] ss:$8 sm:$0xf]
  %v88 = vlaneseq
  %v89 = vshrl.u32 %v88, 7
  %v90 = vsub.s32 0, %v89
  %v91 = vrot.slane %v86, %v90
  %v92 = vlaneseq
  %v93 = vshrl.u32 %v92, 7
  %v94 = vsub.s32 1, %v93
  %v95 = vrot.slane %v86, %v94
  %v96 = vlaneseq
  %v97 = vshrl.u32 %v96, 7
  %v98 = vsub.s32 2, %v97
  %v99 = vrot.slane %v86, %v98
  %v100 = vlaneseq
  %v101 = vshrl.u32 %v100, 7
  %v102 = vsub.s32 3, %v101
  %v103 = vrot.slane %v86, %v102
  %104 = vrot.lane.b32.xlu0 %v91, 112
  %v105 = vpop.permute.xlu0 %104
  %106 = vrot.lane.b32.xlu0 %v95, 112
  %v107 = vpop.permute.xlu0 %106
  %108 = vrot.lane.b32.xlu0 %v99, 112
  %v109 = vpop.permute.xlu0 %108
  %110 = vrot.lane.b32.xlu0 %v103, 112
  %v111 = vpop.permute.xlu0 %110
  %vm112 = vcmask 916480
  %v113 = vsel %vm112, %v105, %v107
  %v114 = vsel %vm112, %v107, %v109
  %v115 = vsel %vm112, %v109, %v111
  %v121 = vmul.f32 %v40, %v105
  %v122 = vmul.f32 %v41, %v113
  %v123 = vmul.f32 %v42, %v114
  %v124 = vmul.f32 %v43, %v115
  %v125 = vmul.f32 %v44, %v111
  %s126 = scalar_lea.vmem %s6, 2
  %v127 = vld [vmem:[%s126] ss:$8 sm:$0xf]
  %v129 = vlaneseq
  %v130 = vshrl.u32 %v129, 7
  %v131 = vsub.s32 0, %v130
  %v132 = vrot.slane %v127, %v131
  %v133 = vlaneseq
  %v134 = vshrl.u32 %v133, 7
  %v135 = vsub.s32 1, %v134
  %v136 = vrot.slane %v127, %v135
  %v137 = vlaneseq
  %v138 = vshrl.u32 %v137, 7
  %v139 = vsub.s32 2, %v138
  %v140 = vrot.slane %v127, %v139
  %v141 = vlaneseq
  %v142 = vshrl.u32 %v141, 7
  %v143 = vsub.s32 3, %v142
  %v144 = vrot.slane %v127, %v143
  %145 = vrot.lane.b32.xlu0 %v132, 113
  %v146 = vpop.permute.xlu0 %145
  %147 = vrot.lane.b32.xlu0 %v136, 113
  %v148 = vpop.permute.xlu0 %147
  %149 = vrot.lane.b32.xlu0 %v140, 113
  %v150 = vpop.permute.xlu0 %149
  %151 = vrot.lane.b32.xlu0 %v144, 113
  %v152 = vpop.permute.xlu0 %151
  %vm153 = vcmask 924672
  %v154 = vsel %vm153, %v146, %v148
  %v155 = vsel %vm153, %v148, %v150
  %v156 = vsel %vm153, %v150, %v152
  %v162 = vmul.f32 %v40, %v146
  %v163 = vmul.f32 %v41, %v154
  %v164 = vmul.f32 %v42, %v155
  %v165 = vmul.f32 %v43, %v156
  %v166 = vmul.f32 %v44, %v152
  %s167 = scalar_lea.vmem %s6, 3
  %v168 = vld [vmem:[%s167] ss:$8 sm:$0xf]
  %v170 = vlaneseq
  %v171 = vshrl.u32 %v170, 7
  %v172 = vsub.s32 0, %v171
  %v173 = vrot.slane %v168, %v172
  %v174 = vlaneseq
  %v175 = vshrl.u32 %v174, 7
  %v176 = vsub.s32 1, %v175
  %v177 = vrot.slane %v168, %v176
  %v178 = vlaneseq
  %v179 = vshrl.u32 %v178, 7
  %v180 = vsub.s32 2, %v179
  %v181 = vrot.slane %v168, %v180
  %v182 = vlaneseq
  %v183 = vshrl.u32 %v182, 7
  %v184 = vsub.s32 3, %v183
  %v185 = vrot.slane %v168, %v184
  %186 = vrot.lane.b32.xlu0 %v173, 127
  %v187 = vpop.permute.xlu0 %186
  %188 = vrot.lane.b32.xlu0 %v177, 127
  %v189 = vpop.permute.xlu0 %188
  %190 = vrot.lane.b32.xlu0 %v181, 127
  %v191 = vpop.permute.xlu0 %190
  %192 = vrot.lane.b32.xlu0 %v185, 127
  %v193 = vpop.permute.xlu0 %192
  %vm194 = vcmask 1039360
  %v195 = vsel %vm194, %v187, %v189
  %v196 = vsel %vm194, %v189, %v191
  %v197 = vsel %vm194, %v191, %v193
  %v203 = vmul.f32 %v40, %v187
  %v204 = vmul.f32 %v41, %v195
  %v205 = vmul.f32 %v42, %v196
  %v206 = vmul.f32 %v43, %v197
  %v207 = vmul.f32 %v44, %v193
  %v208 = vld [vmem:[#allocation2 + $0x8] sm:$0xff]
  %v209 = vld [vmem:[#allocation2 + $0x10] sm:$0xff]
  %v210 = vld [vmem:[#allocation2 + $0x18] sm:$0xff]
  %v211 = vld [vmem:[#allocation2 + $0x20] sm:$0xff]
  %v212 = vld [vmem:[#allocation2 + $0x28] sm:$0xff]
  %s213 = scalar_lea.vmem %s6, 5
  %v214 = vld [vmem:[%s213] ss:$8 sm:$0xf]
  %v216 = vlaneseq
  %v217 = vshrl.u32 %v216, 7
  %v218 = vsub.s32 0, %v217
  %v219 = vrot.slane %v214, %v218
  %v220 = vlaneseq
  %v221 = vshrl.u32 %v220, 7
  %v222 = vsub.s32 1, %v221
  %v223 = vrot.slane %v214, %v222
  %v224 = vlaneseq
  %v225 = vshrl.u32 %v224, 7
  %v226 = vsub.s32 2, %v225
  %v227 = vrot.slane %v214, %v226
  %v228 = vlaneseq
  %v229 = vshrl.u32 %v228, 7
  %v230 = vsub.s32 3, %v229
  %v231 = vrot.slane %v214, %v230
  %232 = vrot.lane.b32.xlu0 %v219, 1
  %v233 = vpop.permute.xlu0 %232
  %234 = vrot.lane.b32.xlu0 %v223, 1
  %v235 = vpop.permute.xlu0 %234
  %236 = vrot.lane.b32.xlu0 %v227, 1
  %v237 = vpop.permute.xlu0 %236
  %238 = vrot.lane.b32.xlu0 %v231, 1
  %v239 = vpop.permute.xlu0 %238
  %vm240 = vcmask 7168
  %v241 = vsel %vm240, %v233, %v235
  %v242 = vsel %vm240, %v235, %v237
  %v243 = vsel %vm240, %v237, %v239
  %v249 = vmul.f32 %v208, %v233
  %v250 = vmul.f32 %v209, %v241
  %v251 = vmul.f32 %v210, %v242
  %v252 = vmul.f32 %v211, %v243
  %v253 = vmul.f32 %v212, %v239
  %s254 = scalar_lea.vmem %s6, 6
  %v255 = vld [vmem:[%s254] ss:$8 sm:$0xf]
  %v257 = vlaneseq
  %v258 = vshrl.u32 %v257, 7
  %v259 = vsub.s32 0, %v258
  %v260 = vrot.slane %v255, %v259
  %v261 = vlaneseq
  %v262 = vshrl.u32 %v261, 7
  %v263 = vsub.s32 1, %v262
  %v264 = vrot.slane %v255, %v263
  %v265 = vlaneseq
  %v266 = vshrl.u32 %v265, 7
  %v267 = vsub.s32 2, %v266
  %v268 = vrot.slane %v255, %v267
  %v269 = vlaneseq
  %v270 = vshrl.u32 %v269, 7
  %v271 = vsub.s32 3, %v270
  %v272 = vrot.slane %v255, %v271
  %273 = vrot.lane.b32.xlu0 %v260, 15
  %v274 = vpop.permute.xlu0 %273
  %275 = vrot.lane.b32.xlu0 %v264, 15
  %v276 = vpop.permute.xlu0 %275
  %277 = vrot.lane.b32.xlu0 %v268, 15
  %v278 = vpop.permute.xlu0 %277
  %279 = vrot.lane.b32.xlu0 %v272, 15
  %v280 = vpop.permute.xlu0 %279
  %vm281 = vcmask 121856
  %v282 = vsel %vm281, %v274, %v276
  %v283 = vsel %vm281, %v276, %v278
  %v284 = vsel %vm281, %v278, %v280
  %v290 = vmul.f32 %v208, %v274
  %v291 = vmul.f32 %v209, %v282
  %v292 = vmul.f32 %v210, %v283
  %v293 = vmul.f32 %v211, %v284
  %v294 = vmul.f32 %v212, %v280
  %s295 = scalar_lea.vmem %s6, 7
  %v296 = vld [vmem:[%s295] ss:$8 sm:$0xf]
  %v298 = vlaneseq
  %v299 = vshrl.u32 %v298, 7
  %v300 = vsub.s32 0, %v299
  %v301 = vrot.slane %v296, %v300
  %v302 = vlaneseq
  %v303 = vshrl.u32 %v302, 7
  %v304 = vsub.s32 1, %v303
  %v305 = vrot.slane %v296, %v304
  %v306 = vlaneseq
  %v307 = vshrl.u32 %v306, 7
  %v308 = vsub.s32 2, %v307
  %v309 = vrot.slane %v296, %v308
  %v310 = vlaneseq
  %v311 = vshrl.u32 %v310, 7
  %v312 = vsub.s32 3, %v311
  %v313 = vrot.slane %v296, %v312
  %314 = vrot.lane.b32.xlu0 %v301, 16
  %v315 = vpop.permute.xlu0 %314
  %316 = vrot.lane.b32.xlu0 %v305, 16
  %v317 = vpop.permute.xlu0 %316
  %318 = vrot.lane.b32.xlu0 %v309, 16
  %v319 = vpop.permute.xlu0 %318
  %320 = vrot.lane.b32.xlu0 %v313, 16
  %v321 = vpop.permute.xlu0 %320
  %vm322 = vcmask 130048
  %v323 = vsel %vm322, %v315, %v317
  %v324 = vsel %vm322, %v317, %v319
  %v325 = vsel %vm322, %v319, %v321
  %v331 = vmul.f32 %v208, %v315
  %v332 = vmul.f32 %v209, %v323
  %v333 = vmul.f32 %v210, %v324
  %v334 = vmul.f32 %v211, %v325
  %v335 = vmul.f32 %v212, %v321
  %s336 = scalar_lea.vmem %s6, 32
  %v337 = vld [vmem:[%s336] ss:$8 sm:$0xf]
  %v339 = vlaneseq
  %v340 = vshrl.u32 %v339, 7
  %v341 = vsub.s32 0, %v340
  %v342 = vrot.slane %v337, %v341
  %v343 = vlaneseq
  %v344 = vshrl.u32 %v343, 7
  %v345 = vsub.s32 1, %v344
  %v346 = vrot.slane %v337, %v345
  %v347 = vlaneseq
  %v348 = vshrl.u32 %v347, 7
  %v349 = vsub.s32 2, %v348
  %v350 = vrot.slane %v337, %v349
  %v351 = vlaneseq
  %v352 = vshrl.u32 %v351, 7
  %v353 = vsub.s32 3, %v352
  %v354 = vrot.slane %v337, %v353
  %355 = vrot.lane.b32.xlu0 %v342, 17
  %v356 = vpop.permute.xlu0 %355
  %357 = vrot.lane.b32.xlu0 %v346, 17
  %v358 = vpop.permute.xlu0 %357
  %359 = vrot.lane.b32.xlu0 %v350, 17
  %v360 = vpop.permute.xlu0 %359
  %361 = vrot.lane.b32.xlu0 %v354, 17
  %v362 = vpop.permute.xlu0 %361
  %vm363 = vcmask 138240
  %v364 = vsel %vm363, %v356, %v358
  %v365 = vsel %vm363, %v358, %v360
  %v366 = vsel %vm363, %v360, %v362
  %v372 = vmul.f32 %v208, %v356
  %v373 = vmul.f32 %v209, %v364
  %v374 = vmul.f32 %v210, %v365
  %v375 = vmul.f32 %v211, %v366
  %v376 = vmul.f32 %v212, %v362
  %382 = vrot.lane.b32.xlu0 %v121, 127
  %v383 = vpop.permute.xlu0 %382
  %384 = vrot.lane.b32.xlu0 %v122, 127
  %v385 = vpop.permute.xlu0 %384
  %386 = vrot.lane.b32.xlu0 %v123, 127
  %v387 = vpop.permute.xlu0 %386
  %388 = vrot.lane.b32.xlu0 %v124, 127
  %v389 = vpop.permute.xlu0 %388
  %390 = vrot.lane.b32.xlu0 %v125, 127
  %v391 = vpop.permute.xlu0 %390
  %v392 = vsel %vm194, %v383, %v385
  %v393 = vsel %vm194, %v385, %v387
  %v394 = vsel %vm194, %v387, %v389
  %v395 = vsel %vm194, %v389, %v391
  %401 = vrot.lane.b32.xlu0 %v162, 126
  %v402 = vpop.permute.xlu0 %401
  %403 = vrot.lane.b32.xlu0 %v163, 126
  %v404 = vpop.permute.xlu0 %403
  %405 = vrot.lane.b32.xlu0 %v164, 126
  %v406 = vpop.permute.xlu0 %405
  %407 = vrot.lane.b32.xlu0 %v165, 126
  %v408 = vpop.permute.xlu0 %407
  %409 = vrot.lane.b32.xlu0 %v166, 126
  %v410 = vpop.permute.xlu0 %409
  %vm411 = vcmask 1031168
  %v412 = vsel %vm411, %v402, %v404
  %v413 = vsel %vm411, %v404, %v406
  %v414 = vsel %vm411, %v406, %v408
  %v415 = vsel %vm411, %v408, %v410
  %421 = vrot.lane.b32.xlu0 %v203, 112
  %v422 = vpop.permute.xlu0 %421
  %423 = vrot.lane.b32.xlu0 %v204, 112
  %v424 = vpop.permute.xlu0 %423
  %425 = vrot.lane.b32.xlu0 %v205, 112
  %v426 = vpop.permute.xlu0 %425
  %427 = vrot.lane.b32.xlu0 %v206, 112
  %v428 = vpop.permute.xlu0 %427
  %429 = vrot.lane.b32.xlu0 %v207, 112
  %v430 = vpop.permute.xlu0 %429
  %v431 = vsel %vm112, %v422, %v424
  %v432 = vsel %vm112, %v424, %v426
  %v433 = vsel %vm112, %v426, %v428
  %v434 = vsel %vm112, %v428, %v430
  %439 = vrot.lane.b32.xlu0 %v41, 111
  %v440 = vpop.permute.xlu0 %439
  %441 = vrot.lane.b32.xlu0 %v42, 111
  %v442 = vpop.permute.xlu0 %441
  %443 = vrot.lane.b32.xlu0 %v43, 111
  %v444 = vpop.permute.xlu0 %443
  %445 = vrot.lane.b32.xlu0 %v44, 111
  %v446 = vpop.permute.xlu0 %445
  %v447 = vsel %vm71, %v440, %v442
  %v448 = vsel %vm71, %v442, %v444
  %v449 = vsel %vm71, %v444, %v446
  %455 = vrot.lane.b32.xlu0 %v249, 110
  %v456 = vpop.permute.xlu0 %455
  %457 = vrot.lane.b32.xlu0 %v250, 110
  %v458 = vpop.permute.xlu0 %457
  %459 = vrot.lane.b32.xlu0 %v251, 110
  %v460 = vpop.permute.xlu0 %459
  %461 = vrot.lane.b32.xlu0 %v252, 110
  %v462 = vpop.permute.xlu0 %461
  %463 = vrot.lane.b32.xlu0 %v253, 110
  %v464 = vpop.permute.xlu0 %463
  %vm465 = vcmask 900096
  %v466 = vsel %vm465, %v456, %v458
  %v467 = vsel %vm465, %v458, %v460
  %v468 = vsel %vm465, %v460, %v462
  %v469 = vsel %vm465, %v462, %v464
  %475 = vrot.lane.b32.xlu0 %v290, 96
  %v476 = vpop.permute.xlu0 %475
  %477 = vrot.lane.b32.xlu0 %v291, 96
  %v478 = vpop.permute.xlu0 %477
  %479 = vrot.lane.b32.xlu0 %v292, 96
  %v480 = vpop.permute.xlu0 %479
  %481 = vrot.lane.b32.xlu0 %v293, 96
  %v482 = vpop.permute.xlu0 %481
  %483 = vrot.lane.b32.xlu0 %v294, 96
  %v484 = vpop.permute.xlu0 %483
  %vm485 = vcmask 785408
  %v486 = vsel %vm485, %v476, %v478
  %v487 = vsel %vm485, %v478, %v480
  %v488 = vsel %vm485, %v480, %v482
  %v489 = vsel %vm485, %v482, %v484
  %495 = vrot.lane.b32.xlu0 %v331, 95
  %v496 = vpop.permute.xlu0 %495
  %497 = vrot.lane.b32.xlu0 %v332, 95
  %v498 = vpop.permute.xlu0 %497
  %499 = vrot.lane.b32.xlu0 %v333, 95
  %v500 = vpop.permute.xlu0 %499
  %501 = vrot.lane.b32.xlu0 %v334, 95
  %v502 = vpop.permute.xlu0 %501
  %503 = vrot.lane.b32.xlu0 %v335, 95
  %v504 = vpop.permute.xlu0 %503
  %vm505 = vcmask 777216
  %v506 = vsel %vm505, %v496, %v498
  %v507 = vsel %vm505, %v498, %v500
  %v508 = vsel %vm505, %v500, %v502
  %v509 = vsel %vm505, %v502, %v504
  %515 = vrot.lane.b32.xlu0 %v372, 94
  %v516 = vpop.permute.xlu0 %515
  %517 = vrot.lane.b32.xlu0 %v373, 94
  %v518 = vpop.permute.xlu0 %517
  %519 = vrot.lane.b32.xlu0 %v374, 94
  %v520 = vpop.permute.xlu0 %519
  %521 = vrot.lane.b32.xlu0 %v375, 94
  %v522 = vpop.permute.xlu0 %521
  %523 = vrot.lane.b32.xlu0 %v376, 94
  %v524 = vpop.permute.xlu0 %523
  %vm525 = vcmask 769024
  %v526 = vsel %vm525, %v516, %v518
  %v527 = vsel %vm525, %v518, %v520
  %v528 = vsel %vm525, %v520, %v522
  %v529 = vsel %vm525, %v522, %v524
  %v530 = vld [vmem:[%s1] sm:$0xff]
  %532 = vset.pattern.permute.xlu0 0
  %533 = vperm.xlu0 %532, %v31
  %v534 = vpop.permute.xlu0 %533
  %541 = vrot.lane.b32.xlu0 %v80, 17
  %v542 = vpop.permute.xlu0 %541
  %543 = vrot.lane.b32.xlu0 %v81, 17
  %v544 = vpop.permute.xlu0 %543
  %545 = vrot.lane.b32.xlu0 %v82, 17
  %v546 = vpop.permute.xlu0 %545
  %547 = vrot.lane.b32.xlu0 %v83, 17
  %v548 = vpop.permute.xlu0 %547
  %549 = vrot.lane.b32.xlu0 %v84, 17
  %v550 = vpop.permute.xlu0 %549
  %551 = vrot.lane.b32.xlu0 %v392, 17
  %v552 = vpop.permute.xlu0 %551
  %553 = vrot.lane.b32.xlu0 %v393, 17
  %v554 = vpop.permute.xlu0 %553
  %555 = vrot.lane.b32.xlu0 %v394, 17
  %v556 = vpop.permute.xlu0 %555
  %557 = vrot.lane.b32.xlu0 %v395, 17
  %v558 = vpop.permute.xlu0 %557
  %559 = vrot.lane.b32.xlu0 %v391, 17
  %v560 = vpop.permute.xlu0 %559
  %561 = vrot.lane.b32.xlu0 %v412, 17
  %v562 = vpop.permute.xlu0 %561
  %563 = vrot.lane.b32.xlu0 %v413, 17
  %v564 = vpop.permute.xlu0 %563
  %565 = vrot.lane.b32.xlu0 %v414, 17
  %v566 = vpop.permute.xlu0 %565
  %567 = vrot.lane.b32.xlu0 %v415, 17
  %v568 = vpop.permute.xlu0 %567
  %569 = vrot.lane.b32.xlu0 %v410, 17
  %v570 = vpop.permute.xlu0 %569
  %571 = vrot.lane.b32.xlu0 %v431, 17
  %v572 = vpop.permute.xlu0 %571
  %573 = vrot.lane.b32.xlu0 %v432, 17
  %v574 = vpop.permute.xlu0 %573
  %575 = vrot.lane.b32.xlu0 %v433, 17
  %v576 = vpop.permute.xlu0 %575
  %577 = vrot.lane.b32.xlu0 %v434, 17
  %v578 = vpop.permute.xlu0 %577
  %579 = vrot.lane.b32.xlu0 %v430, 17
  %v580 = vpop.permute.xlu0 %579
  %581 = vrot.lane.b32.xlu0 %v440, 17
  %v582 = vpop.permute.xlu0 %581
  %583 = vrot.lane.b32.xlu0 %v447, 17
  %v584 = vpop.permute.xlu0 %583
  %585 = vrot.lane.b32.xlu0 %v448, 17
  %v586 = vpop.permute.xlu0 %585
  %587 = vrot.lane.b32.xlu0 %v449, 17
  %v588 = vpop.permute.xlu0 %587
  %589 = vrot.lane.b32.xlu0 %v446, 17
  %v590 = vpop.permute.xlu0 %589
  %591 = vrot.lane.b32.xlu0 %v456, 17
  %v592 = vpop.permute.xlu0 %591
  %593 = vrot.lane.b32.xlu0 %v466, 17
  %v594 = vpop.permute.xlu0 %593
  %595 = vrot.lane.b32.xlu0 %v467, 17
  %v596 = vpop.permute.xlu0 %595
  %597 = vrot.lane.b32.xlu0 %v468, 17
  %v598 = vpop.permute.xlu0 %597
  %599 = vrot.lane.b32.xlu0 %v469, 17
  %v600 = vpop.permute.xlu0 %599
  %601 = vrot.lane.b32.xlu0 %v476, 17
  %v602 = vpop.permute.xlu0 %601
  %603 = vrot.lane.b32.xlu0 %v486, 17
  %v604 = vpop.permute.xlu0 %603
  %605 = vrot.lane.b32.xlu0 %v487, 17
  %v606 = vpop.permute.xlu0 %605
  %607 = vrot.lane.b32.xlu0 %v488, 17
  %v608 = vpop.permute.xlu0 %607
  %609 = vrot.lane.b32.xlu0 %v489, 17
  %v610 = vpop.permute.xlu0 %609
  %611 = vrot.lane.b32.xlu0 %v496, 17
  %v612 = vpop.permute.xlu0 %611
  %613 = vrot.lane.b32.xlu0 %v506, 17
  %v614 = vpop.permute.xlu0 %613
  %615 = vrot.lane.b32.xlu0 %v507, 17
  %v616 = vpop.permute.xlu0 %615
  %617 = vrot.lane.b32.xlu0 %v508, 17
  %v618 = vpop.permute.xlu0 %617
  %619 = vrot.lane.b32.xlu0 %v509, 17
  %v620 = vpop.permute.xlu0 %619
  %621 = vrot.lane.b32.xlu0 %v516, 17
  %v622 = vpop.permute.xlu0 %621
  %623 = vrot.lane.b32.xlu0 %v526, 17
  %v624 = vpop.permute.xlu0 %623
  %625 = vrot.lane.b32.xlu0 %v527, 17
  %v626 = vpop.permute.xlu0 %625
  %627 = vrot.lane.b32.xlu0 %v528, 17
  %v628 = vpop.permute.xlu0 %627
  %629 = vrot.lane.b32.xlu0 %v529, 17
  %v630 = vpop.permute.xlu0 %629
  %v631 = vsel %vm363, %v542, %v544
  %v632 = vsel %vm363, %v544, %v546
  %v633 = vsel %vm363, %v546, %v548
  %v634 = vsel %vm363, %v548, %v550
  %v635 = vsel %vm363, %v552, %v554
  %v636 = vsel %vm363, %v554, %v556
  %v637 = vsel %vm363, %v556, %v558
  %v638 = vsel %vm363, %v558, %v560
  %v639 = vsel %vm363, %v562, %v564
  %v640 = vsel %vm363, %v564, %v566
  %v641 = vsel %vm363, %v566, %v568
  %v642 = vsel %vm363, %v568, %v570
  %v643 = vsel %vm363, %v572, %v574
  %v644 = vsel %vm363, %v574, %v576
  %v645 = vsel %vm363, %v576, %v578
  %v646 = vsel %vm363, %v578, %v580
  %v647 = vsel %vm363, %v582, %v584
  %v648 = vsel %vm363, %v584, %v586
  %v649 = vsel %vm363, %v586, %v588
  %v650 = vsel %vm363, %v588, %v590
  %v651 = vsel %vm363, %v592, %v594
  %v652 = vsel %vm363, %v594, %v596
  %v653 = vsel %vm363, %v596, %v598
  %v654 = vsel %vm363, %v598, %v600
  %v655 = vsel %vm363, %v602, %v604
  %v656 = vsel %vm363, %v604, %v606
  %v657 = vsel %vm363, %v606, %v608
  %v658 = vsel %vm363, %v608, %v610
  %v659 = vsel %vm363, %v612, %v614
  %v660 = vsel %vm363, %v614, %v616
  %v661 = vsel %vm363, %v616, %v618
  %v662 = vsel %vm363, %v618, %v620
  %v663 = vsel %vm363, %v622, %v624
  %v664 = vsel %vm363, %v624, %v626
  %v665 = vsel %vm363, %v626, %v628
  %v666 = vsel %vm363, %v628, %v630
  %vm703 = vcmask 588800
  %v705 = vsel %vm703, %v530, 0
  %707 = vmatprep.subr.mxu0 %v632
  %708 = vmatpush1.msra.mxu0 %v631
  %709 = vmatprep.subr.mxu0 %v636
  %710 = vmatpush1.msra.mxu0 %v635
  %711 = vmatprep.subr.mxu0 %v640
  %712 = vmatpush1.msra.mxu0 %v639
  %713 = vmatprep.subr.mxu0 %v644
  %714 = vmatpush1.msra.mxu0 %v643
  %715 = vmatprep.subr.mxu0 %v648
  %716 = vmatpush1.msra.mxu0 %v647
  %717 = vmatprep.subr.mxu0 %v652
  %718 = vmatpush1.msra.mxu0 %v651
  %719 = vmatprep.subr.mxu0 %v656
  %720 = vmatpush1.msra.mxu0 %v655
  %721 = vmatprep.subr.mxu0 %v660
  %722 = vmatpush1.msra.mxu0 %v659
  %723 = vmatprep.subr.mxu0 %v664
  %724 = vmatpush1.msra.mxu0 %v663
  %725 = vmatprep.subr.mxu0 0.0
  %726 = vmatpush1.msra.mxu0 0.0
  %727 = vmatprep.subr.mxu0 0.0
  %728 = vmatpush1.msra.mxu0 0.0
  %729 = vmatprep.subr.mxu0 0.0
  %730 = vmatpush1.msra.mxu0 0.0
  %731 = vmatprep.subr.mxu0 0.0
  %732 = vmatpush1.msra.mxu0 0.0
  %733 = vmatprep.subr.mxu0 0.0
  %734 = vmatpush1.msra.mxu0 0.0
  %735 = vmatprep.subr.mxu0 0.0
  %736 = vmatpush1.msra.mxu0 0.0
  %737 = vmatprep.subr.mxu0 0.0
  %738 = vmatpush1.msra.mxu0 0.0
  %739 = vmatprep.subr.mxu0 0.0
  %740 = vmatpush1.msra.mxu0 0.0
  %741 = vmatprep.subr.mxu0 0.0
  %742 = vmatpush1.msra.mxu0 0.0
  %743 = vmatprep.subr.mxu0 0.0
  %744 = vmatpush1.msra.mxu0 0.0
  %745 = vmatprep.subr.mxu0 0.0
  %746 = vmatpush1.msra.mxu0 0.0
  %747 = vmatprep.subr.mxu0 0.0
  %748 = vmatpush1.msra.mxu0 0.0
  %749 = vmatprep.subr.mxu0 0.0
  %750 = vmatpush1.msra.mxu0 0.0
  %751 = vmatprep.subr.mxu0 0.0
  %752 = vmatpush1.msra.mxu0 0.0
  %753 = vmatprep.subr.mxu0 0.0
  %754 = vmatpush1.msra.mxu0 0.0
  %755 = vmatprep.subr.mxu0 0.0
  %756 = vmatpush1.msra.mxu0 0.0
  %757 = vmatprep.subr.mxu0 0.0
  %758 = vmatpush1.msra.mxu0 0.0
  %759 = vmatprep.subr.mxu0 0.0
  %760 = vmatpush1.msra.mxu0 0.0
  %761 = vmatprep.subr.mxu0 0.0
  %762 = vmatpush1.msra.mxu0 0.0
  %763 = vmatprep.subr.mxu0 0.0
  %764 = vmatpush1.msra.mxu0 0.0
  %765 = vmatprep.subr.mxu0 0.0
  %766 = vmatpush1.msra.mxu0 0.0
  %767 = vmatprep.subr.mxu0 0.0
  %768 = vmatpush1.msra.mxu0 0.0
  %769 = vmatprep.subr.mxu0 0.0
  %770 = vmatpush1.msra.mxu0 0.0
  %771 = vmatprep.mubr.f32.mxu0 0.0
  %772 = vmatmul.mubr.f32.gmra.mrb[0].mxu0 %v705
  %v773 = vpop.f32.mrb[0].mxu0
  %v774 = vadd.f32 %v534, %v773
  %v775 = vpop.f32.mrb[0].mxu0
  %v776 = vadd.f32 %v534, %v775
  %777 = vdwg.mxu0
  %778 = vmatprep.subr.mxu0 %v634
  %779 = vmatpush1.msra.mxu0 %v633
  %780 = vmatprep.subr.mxu0 %v638
  %781 = vmatpush1.msra.mxu0 %v637
  %782 = vmatprep.subr.mxu0 %v642
  %783 = vmatpush1.msra.mxu0 %v641
  %784 = vmatprep.subr.mxu0 %v646
  %785 = vmatpush1.msra.mxu0 %v645
  %786 = vmatprep.subr.mxu0 %v650
  %787 = vmatpush1.msra.mxu0 %v649
  %788 = vmatprep.subr.mxu0 %v654
  %789 = vmatpush1.msra.mxu0 %v653
  %790 = vmatprep.subr.mxu0 %v658
  %791 = vmatpush1.msra.mxu0 %v657
  %792 = vmatprep.subr.mxu0 %v662
  %793 = vmatpush1.msra.mxu0 %v661
  %794 = vmatprep.subr.mxu0 %v666
  %795 = vmatpush1.msra.mxu0 %v665
  %796 = vmatprep.subr.mxu0 0.0
  %797 = vmatpush1.msra.mxu0 0.0
  %798 = vmatprep.subr.mxu0 0.0
  %799 = vmatpush1.msra.mxu0 0.0
  %800 = vmatprep.subr.mxu0 0.0
  %801 = vmatpush1.msra.mxu0 0.0
  %802 = vmatprep.subr.mxu0 0.0
  %803 = vmatpush1.msra.mxu0 0.0
  %804 = vmatprep.subr.mxu0 0.0
  %805 = vmatpush1.msra.mxu0 0.0
  %806 = vmatprep.subr.mxu0 0.0
  %807 = vmatpush1.msra.mxu0 0.0
  %808 = vmatprep.subr.mxu0 0.0
  %809 = vmatpush1.msra.mxu0 0.0
  %810 = vmatprep.subr.mxu0 0.0
  %811 = vmatpush1.msra.mxu0 0.0
  %812 = vmatprep.subr.mxu0 0.0
  %813 = vmatpush1.msra.mxu0 0.0
  %814 = vmatprep.subr.mxu0 0.0
  %815 = vmatpush1.msra.mxu0 0.0
  %816 = vmatprep.subr.mxu0 0.0
  %817 = vmatpush1.msra.mxu0 0.0
  %818 = vmatprep.subr.mxu0 0.0
  %819 = vmatpush1.msra.mxu0 0.0
  %820 = vmatprep.subr.mxu0 0.0
  %821 = vmatpush1.msra.mxu0 0.0
  %822 = vmatprep.subr.mxu0 0.0
  %823 = vmatpush1.msra.mxu0 0.0
  %824 = vmatprep.subr.mxu0 0.0
  %825 = vmatpush1.msra.mxu0 0.0
  %826 = vmatprep.subr.mxu0 0.0
  %827 = vmatpush1.msra.mxu0 0.0
  %828 = vmatprep.subr.mxu0 0.0
  %829 = vmatpush1.msra.mxu0 0.0
  %830 = vmatprep.subr.mxu0 0.0
  %831 = vmatpush1.msra.mxu0 0.0
  %832 = vmatprep.subr.mxu0 0.0
  %833 = vmatpush1.msra.mxu0 0.0
  %834 = vmatprep.subr.mxu0 0.0
  %835 = vmatpush1.msra.mxu0 0.0
  %836 = vmatprep.subr.mxu0 0.0
  %837 = vmatpush1.msra.mxu0 0.0
  %838 = vmatprep.subr.mxu0 0.0
  %839 = vmatpush1.msra.mxu0 0.0
  %840 = vmatprep.subr.mxu0 0.0
  %841 = vmatpush1.msra.mxu0 0.0
  %842 = vmatprep.mubr.f32.mxu0 0.0
  %843 = vmatmul.mubr.f32.gmra.mrb[0].mxu0 %v705
  %v844 = vpop.f32.mrb[0].mxu0
  %v845 = vadd.f32 %v534, %v844
  %v846 = vpop.f32.mrb[0].mxu0
  %v847 = vadd.f32 %v534, %v846
  %848 = vdwg.mxu0
  %v849 = vmax.f32 %v774, 0.0
  %v850 = vmax.f32 %v776, 0.0
  %v851 = vmax.f32 %v845, 0.0
  %v852 = vmax.f32 %v847, 0.0
  %853 = vst [vmem:[#allocation2 + $0x8] sm:$0xff] %v849
  %854 = vst [vmem:[#allocation2 + $0x10] sm:$0xff] %v850
  %855 = vst [vmem:[#allocation2 + $0x18] sm:$0xff] %v851
  %856 = vst [vmem:[#allocation2 + $0x20] sm:$0xff] %v852
  %v857 = vld [vmem:[#allocation2] sm:$0xff]
  %v858 = vld [vmem:[#allocation2 + $0x8] sm:$0xff]
  %v859 = vld [vmem:[#allocation2 + $0x10] sm:$0xff]
  %v860 = vld [vmem:[#allocation2 + $0x18] sm:$0xff]
  %v861 = vld [vmem:[#allocation2 + $0x20] sm:$0xff]
  %v862 = vld [vmem:[%s6] ss:$8 sm:$0xf]
  %v864 = vlaneseq
  %v865 = vshrl.u32 %v864, 7
  %v866 = vsub.s32 0, %v865
  %v867 = vrot.slane %v862, %v866
  %v868 = vlaneseq
  %v869 = vshrl.u32 %v868, 7
  %v870 = vsub.s32 1, %v869
  %v871 = vrot.slane %v862, %v870
  %v872 = vlaneseq
  %v873 = vshrl.u32 %v872, 7
  %v874 = vsub.s32 2, %v873
  %v875 = vrot.slane %v862, %v874
  %v876 = vlaneseq
  %v877 = vshrl.u32 %v876, 7
  %v878 = vsub.s32 3, %v877
  %v879 = vrot.slane %v862, %v878
  %880 = vrot.lane.b32.xlu0 %v867, 111
  %v881 = vpop.permute.xlu0 %880
  %882 = vrot.lane.b32.xlu0 %v871, 111
  %v883 = vpop.permute.xlu0 %882
  %884 = vrot.lane.b32.xlu0 %v875, 111
  %v885 = vpop.permute.xlu0 %884
  %886 = vrot.lane.b32.xlu0 %v879, 111
  %v887 = vpop.permute.xlu0 %886
  %v888 = vsel %vm71, %v881, %v883
  %v889 = vsel %vm71, %v883, %v885
  %v890 = vsel %vm71, %v885, %v887
  %v896 = vmul.f32 %v857, %v881
  %v897 = vmul.f32 %v858, %v888
  %v898 = vmul.f32 %v859, %v889
  %v899 = vmul.f32 %v860, %v890
  %v900 = vmul.f32 %v861, %v887
  %v901 = vld [vmem:[%s85] ss:$8 sm:$0xf]
  %v903 = vlaneseq
  %v904 = vshrl.u32 %v903, 7
  %v905 = vsub.s32 0, %v904
  %v906 = vrot.slane %v901, %v905
  %v907 = vlaneseq
  %v908 = vshrl.u32 %v907, 7
  %v909 = vsub.s32 1, %v908
  %v910 = vrot.slane %v901, %v909
  %v911 = vlaneseq
  %v912 = vshrl.u32 %v911, 7
  %v913 = vsub.s32 2, %v912
  %v914 = vrot.slane %v901, %v913
  %v915 = vlaneseq
  %v916 = vshrl.u32 %v915, 7
  %v917 = vsub.s32 3, %v916
  %v918 = vrot.slane %v901, %v917
  %919 = vrot.lane.b32.xlu0 %v906, 112
  %v920 = vpop.permute.xlu0 %919
  %921 = vrot.lane.b32.xlu0 %v910, 112
  %v922 = vpop.permute.xlu0 %921
  %923 = vrot.lane.b32.xlu0 %v914, 112
  %v924 = vpop.permute.xlu0 %923
  %925 = vrot.lane.b32.xlu0 %v918, 112
  %v926 = vpop.permute.xlu0 %925
  %v927 = vsel %vm112, %v920, %v922
  %v928 = vsel %vm112, %v922, %v924
  %v929 = vsel %vm112, %v924, %v926
  %v935 = vmul.f32 %v857, %v920
  %v936 = vmul.f32 %v858, %v927
  %v937 = vmul.f32 %v859, %v928
  %v938 = vmul.f32 %v860, %v929
  %v939 = vmul.f32 %v861, %v926
  %v940 = vld [vmem:[%s126] ss:$8 sm:$0xf]
  %v942 = vlaneseq
  %v943 = vshrl.u32 %v942, 7
  %v944 = vsub.s32 0, %v943
  %v945 = vrot.slane %v940, %v944
  %v946 = vlaneseq
  %v947 = vshrl.u32 %v946, 7
  %v948 = vsub.s32 1, %v947
  %v949 = vrot.slane %v940, %v948
  %v950 = vlaneseq
  %v951 = vshrl.u32 %v950, 7
  %v952 = vsub.s32 2, %v951
  %v953 = vrot.slane %v940, %v952
  %v954 = vlaneseq
  %v955 = vshrl.u32 %v954, 7
  %v956 = vsub.s32 3, %v955
  %v957 = vrot.slane %v940, %v956
  %958 = vrot.lane.b32.xlu0 %v945, 113
  %v959 = vpop.permute.xlu0 %958
  %960 = vrot.lane.b32.xlu0 %v949, 113
  %v961 = vpop.permute.xlu0 %960
  %962 = vrot.lane.b32.xlu0 %v953, 113
  %v963 = vpop.permute.xlu0 %962
  %964 = vrot.lane.b32.xlu0 %v957, 113
  %v965 = vpop.permute.xlu0 %964
  %v966 = vsel %vm153, %v959, %v961
  %v967 = vsel %vm153, %v961, %v963
  %v968 = vsel %vm153, %v963, %v965
  %v974 = vmul.f32 %v857, %v959
  %v975 = vmul.f32 %v858, %v966
  %v976 = vmul.f32 %v859, %v967
  %v977 = vmul.f32 %v860, %v968
  %v978 = vmul.f32 %v861, %v965
  %v979 = vld [vmem:[%s167] ss:$8 sm:$0xf]
  %v981 = vlaneseq
  %v982 = vshrl.u32 %v981, 7
  %v983 = vsub.s32 0, %v982
  %v984 = vrot.slane %v979, %v983
  %v985 = vlaneseq
  %v986 = vshrl.u32 %v985, 7
  %v987 = vsub.s32 1, %v986
  %v988 = vrot.slane %v979, %v987
  %v989 = vlaneseq
  %v990 = vshrl.u32 %v989, 7
  %v991 = vsub.s32 2, %v990
  %v992 = vrot.slane %v979, %v991
  %v993 = vlaneseq
  %v994 = vshrl.u32 %v993, 7
  %v995 = vsub.s32 3, %v994
  %v996 = vrot.slane %v979, %v995
  %997 = vrot.lane.b32.xlu0 %v984, 127
  %v998 = vpop.permute.xlu0 %997
  %999 = vrot.lane.b32.xlu0 %v988, 127
  %v1000 = vpop.permute.xlu0 %999
  %1001 = vrot.lane.b32.xlu0 %v992, 127
  %v1002 = vpop.permute.xlu0 %1001
  %1003 = vrot.lane.b32.xlu0 %v996, 127
  %v1004 = vpop.permute.xlu0 %1003
  %v1005 = vsel %vm194, %v998, %v1000
  %v1006 = vsel %vm194, %v1000, %v1002
  %v1007 = vsel %vm194, %v1002, %v1004
  %v1013 = vmul.f32 %v857, %v998
  %v1014 = vmul.f32 %v858, %v1005
  %v1015 = vmul.f32 %v859, %v1006
  %v1016 = vmul.f32 %v860, %v1007
  %v1017 = vmul.f32 %v861, %v1004
  %v1018 = vld [vmem:[#allocation2 + $0x8] sm:$0xff]
  %v1019 = vld [vmem:[#allocation2 + $0x10] sm:$0xff]
  %v1020 = vld [vmem:[#allocation2 + $0x18] sm:$0xff]
  %v1021 = vld [vmem:[#allocation2 + $0x20] sm:$0xff]
  %v1022 = vld [vmem:[#allocation2 + $0x28] sm:$0xff]
  %v1023 = vld [vmem:[%s213] ss:$8 sm:$0xf]
  %v1025 = vlaneseq
  %v1026 = vshrl.u32 %v1025, 7
  %v1027 = vsub.s32 0, %v1026
  %v1028 = vrot.slane %v1023, %v1027
  %v1029 = vlaneseq
  %v1030 = vshrl.u32 %v1029, 7
  %v1031 = vsub.s32 1, %v1030
  %v1032 = vrot.slane %v1023, %v1031
  %v1033 = vlaneseq
  %v1034 = vshrl.u32 %v1033, 7
  %v1035 = vsub.s32 2, %v1034
  %v1036 = vrot.slane %v1023, %v1035
  %v1037 = vlaneseq
  %v1038 = vshrl.u32 %v1037, 7
  %v1039 = vsub.s32 3, %v1038
  %v1040 = vrot.slane %v1023, %v1039
  %1041 = vrot.lane.b32.xlu0 %v1028, 1
  %v1042 = vpop.permute.xlu0 %1041
  %1043 = vrot.lane.b32.xlu0 %v1032, 1
  %v1044 = vpop.permute.xlu0 %1043
  %1045 = vrot.lane.b32.xlu0 %v1036, 1
  %v1046 = vpop.permute.xlu0 %1045
  %1047 = vrot.lane.b32.xlu0 %v1040, 1
  %v1048 = vpop.permute.xlu0 %1047
  %v1049 = vsel %vm240, %v1042, %v1044
  %v1050 = vsel %vm240, %v1044, %v1046
  %v1051 = vsel %vm240, %v1046, %v1048
  %v1057 = vmul.f32 %v1018, %v1042
  %v1058 = vmul.f32 %v1019, %v1049
  %v1059 = vmul.f32 %v1020, %v1050
  %v1060 = vmul.f32 %v1021, %v1051
  %v1061 = vmul.f32 %v1022, %v1048
  %v1062 = vld [vmem:[%s254] ss:$8 sm:$0xf]
  %v1064 = vlaneseq
  %v1065 = vshrl.u32 %v1064, 7
  %v1066 = vsub.s32 0, %v1065
  %v1067 = vrot.slane %v1062, %v1066
  %v1068 = vlaneseq
  %v1069 = vshrl.u32 %v1068, 7
  %v1070 = vsub.s32 1, %v1069
  %v1071 = vrot.slane %v1062, %v1070
  %v1072 = vlaneseq
  %v1073 = vshrl.u32 %v1072, 7
  %v1074 = vsub.s32 2, %v1073
  %v1075 = vrot.slane %v1062, %v1074
  %v1076 = vlaneseq
  %v1077 = vshrl.u32 %v1076, 7
  %v1078 = vsub.s32 3, %v1077
  %v1079 = vrot.slane %v1062, %v1078
  %1080 = vrot.lane.b32.xlu0 %v1067, 15
  %v1081 = vpop.permute.xlu0 %1080
  %1082 = vrot.lane.b32.xlu0 %v1071, 15
  %v1083 = vpop.permute.xlu0 %1082
  %1084 = vrot.lane.b32.xlu0 %v1075, 15
  %v1085 = vpop.permute.xlu0 %1084
  %1086 = vrot.lane.b32.xlu0 %v1079, 15
  %v1087 = vpop.permute.xlu0 %1086
  %v1088 = vsel %vm281, %v1081, %v1083
  %v1089 = vsel %vm281, %v1083, %v1085
  %v1090 = vsel %vm281, %v1085, %v1087
  %v1096 = vmul.f32 %v1018, %v1081
  %v1097 = vmul.f32 %v1019, %v1088
  %v1098 = vmul.f32 %v1020, %v1089
  %v1099 = vmul.f32 %v1021, %v1090
  %v1100 = vmul.f32 %v1022, %v1087
  %v1101 = vld [vmem:[%s295] ss:$8 sm:$0xf]
  %v1103 = vlaneseq
  %v1104 = vshrl.u32 %v1103, 7
  %v1105 = vsub.s32 0, %v1104
  %v1106 = vrot.slane %v1101, %v1105
  %v1107 = vlaneseq
  %v1108 = vshrl.u32 %v1107, 7
  %v1109 = vsub.s32 1, %v1108
  %v1110 = vrot.slane %v1101, %v1109
  %v1111 = vlaneseq
  %v1112 = vshrl.u32 %v1111, 7
  %v1113 = vsub.s32 2, %v1112
  %v1114 = vrot.slane %v1101, %v1113
  %v1115 = vlaneseq
  %v1116 = vshrl.u32 %v1115, 7
  %v1117 = vsub.s32 3, %v1116
  %v1118 = vrot.slane %v1101, %v1117
  %1119 = vrot.lane.b32.xlu0 %v1106, 16
  %v1120 = vpop.permute.xlu0 %1119
  %1121 = vrot.lane.b32.xlu0 %v1110, 16
  %v1122 = vpop.permute.xlu0 %1121
  %1123 = vrot.lane.b32.xlu0 %v1114, 16
  %v1124 = vpop.permute.xlu0 %1123
  %1125 = vrot.lane.b32.xlu0 %v1118, 16
  %v1126 = vpop.permute.xlu0 %1125
  %v1127 = vsel %vm322, %v1120, %v1122
  %v1128 = vsel %vm322, %v1122, %v1124
  %v1129 = vsel %vm322, %v1124, %v1126
  %v1135 = vmul.f32 %v1018, %v1120
  %v1136 = vmul.f32 %v1019, %v1127
  %v1137 = vmul.f32 %v1020, %v1128
  %v1138 = vmul.f32 %v1021, %v1129
  %v1139 = vmul.f32 %v1022, %v1126
  %v1140 = vld [vmem:[%s336] ss:$8 sm:$0xf]
  %v1142 = vlaneseq
  %v1143 = vshrl.u32 %v1142, 7
  %v1144 = vsub.s32 0, %v1143
  %v1145 = vrot.slane %v1140, %v1144
  %v1146 = vlaneseq
  %v1147 = vshrl.u32 %v1146, 7
  %v1148 = vsub.s32 1, %v1147
  %v1149 = vrot.slane %v1140, %v1148
  %v1150 = vlaneseq
  %v1151 = vshrl.u32 %v1150, 7
  %v1152 = vsub.s32 2, %v1151
  %v1153 = vrot.slane %v1140, %v1152
  %v1154 = vlaneseq
  %v1155 = vshrl.u32 %v1154, 7
  %v1156 = vsub.s32 3, %v1155
  %v1157 = vrot.slane %v1140, %v1156
  %1158 = vrot.lane.b32.xlu0 %v1145, 17
  %v1159 = vpop.permute.xlu0 %1158
  %1160 = vrot.lane.b32.xlu0 %v1149, 17
  %v1161 = vpop.permute.xlu0 %1160
  %1162 = vrot.lane.b32.xlu0 %v1153, 17
  %v1163 = vpop.permute.xlu0 %1162
  %1164 = vrot.lane.b32.xlu0 %v1157, 17
  %v1165 = vpop.permute.xlu0 %1164
  %v1166 = vsel %vm363, %v1159, %v1161
  %v1167 = vsel %vm363, %v1161, %v1163
  %v1168 = vsel %vm363, %v1163, %v1165
  %v1174 = vmul.f32 %v1018, %v1159
  %v1175 = vmul.f32 %v1019, %v1166
  %v1176 = vmul.f32 %v1020, %v1167
  %v1177 = vmul.f32 %v1021, %v1168
  %v1178 = vmul.f32 %v1022, %v1165
  %1184 = vrot.lane.b32.xlu0 %v935, 127
  %v1185 = vpop.permute.xlu0 %1184
  %1186 = vrot.lane.b32.xlu0 %v936, 127
  %v1187 = vpop.permute.xlu0 %1186
  %1188 = vrot.lane.b32.xlu0 %v937, 127
  %v1189 = vpop.permute.xlu0 %1188
  %1190 = vrot.lane.b32.xlu0 %v938, 127
  %v1191 = vpop.permute.xlu0 %1190
  %1192 = vrot.lane.b32.xlu0 %v939, 127
  %v1193 = vpop.permute.xlu0 %1192
  %v1194 = vsel %vm194, %v1185, %v1187
  %v1195 = vsel %vm194, %v1187, %v1189
  %v1196 = vsel %vm194, %v1189, %v1191
  %v1197 = vsel %vm194, %v1191, %v1193
  %1203 = vrot.lane.b32.xlu0 %v974, 126
  %v1204 = vpop.permute.xlu0 %1203
  %1205 = vrot.lane.b32.xlu0 %v975, 126
  %v1206 = vpop.permute.xlu0 %1205
  %1207 = vrot.lane.b32.xlu0 %v976, 126
  %v1208 = vpop.permute.xlu0 %1207
  %1209 = vrot.lane.b32.xlu0 %v977, 126
  %v1210 = vpop.permute.xlu0 %1209
  %1211 = vrot.lane.b32.xlu0 %v978, 126
  %v1212 = vpop.permute.xlu0 %1211
  %v1213 = vsel %vm411, %v1204, %v1206
  %v1214 = vsel %vm411, %v1206, %v1208
  %v1215 = vsel %vm411, %v1208, %v1210
  %v1216 = vsel %vm411, %v1210, %v1212
  %1222 = vrot.lane.b32.xlu0 %v1013, 112
  %v1223 = vpop.permute.xlu0 %1222
  %1224 = vrot.lane.b32.xlu0 %v1014, 112
  %v1225 = vpop.permute.xlu0 %1224
  %1226 = vrot.lane.b32.xlu0 %v1015, 112
  %v1227 = vpop.permute.xlu0 %1226
  %1228 = vrot.lane.b32.xlu0 %v1016, 112
  %v1229 = vpop.permute.xlu0 %1228
  %1230 = vrot.lane.b32.xlu0 %v1017, 112
  %v1231 = vpop.permute.xlu0 %1230
  %v1232 = vsel %vm112, %v1223, %v1225
  %v1233 = vsel %vm112, %v1225, %v1227
  %v1234 = vsel %vm112, %v1227, %v1229
  %v1235 = vsel %vm112, %v1229, %v1231
  %1240 = vrot.lane.b32.xlu0 %v858, 111
  %v1241 = vpop.permute.xlu0 %1240
  %1242 = vrot.lane.b32.xlu0 %v859, 111
  %v1243 = vpop.permute.xlu0 %1242
  %1244 = vrot.lane.b32.xlu0 %v860, 111
  %v1245 = vpop.permute.xlu0 %1244
  %1246 = vrot.lane.b32.xlu0 %v861, 111
  %v1247 = vpop.permute.xlu0 %1246
  %v1248 = vsel %vm71, %v1241, %v1243
  %v1249 = vsel %vm71, %v1243, %v1245
  %v1250 = vsel %vm71, %v1245, %v1247
  %1256 = vrot.lane.b32.xlu0 %v1057, 110
  %v1257 = vpop.permute.xlu0 %1256
  %1258 = vrot.lane.b32.xlu0 %v1058, 110
  %v1259 = vpop.permute.xlu0 %1258
  %1260 = vrot.lane.b32.xlu0 %v1059, 110
  %v1261 = vpop.permute.xlu0 %1260
  %1262 = vrot.lane.b32.xlu0 %v1060, 110
  %v1263 = vpop.permute.xlu0 %1262
  %1264 = vrot.lane.b32.xlu0 %v1061, 110
  %v1265 = vpop.permute.xlu0 %1264
  %v1266 = vsel %vm465, %v1257, %v1259
  %v1267 = vsel %vm465, %v1259, %v1261
  %v1268 = vsel %vm465, %v1261, %v1263
  %v1269 = vsel %vm465, %v1263, %v1265
  %1275 = vrot.lane.b32.xlu0 %v1096, 96
  %v1276 = vpop.permute.xlu0 %1275
  %1277 = vrot.lane.b32.xlu0 %v1097, 96
  %v1278 = vpop.permute.xlu0 %1277
  %1279 = vrot.lane.b32.xlu0 %v1098, 96
  %v1280 = vpop.permute.xlu0 %1279
  %1281 = vrot.lane.b32.xlu0 %v1099, 96
  %v1282 = vpop.permute.xlu0 %1281
  %1283 = vrot.lane.b32.xlu0 %v1100, 96
  %v1284 = vpop.permute.xlu0 %1283
  %v1285 = vsel %vm485, %v1276, %v1278
  %v1286 = vsel %vm485, %v1278, %v1280
  %v1287 = vsel %vm485, %v1280, %v1282
  %v1288 = vsel %vm485, %v1282, %v1284
  %1294 = vrot.lane.b32.xlu0 %v1135, 95
  %v1295 = vpop.permute.xlu0 %1294
  %1296 = vrot.lane.b32.xlu0 %v1136, 95
  %v1297 = vpop.permute.xlu0 %1296
  %1298 = vrot.lane.b32.xlu0 %v1137, 95
  %v1299 = vpop.permute.xlu0 %1298
  %1300 = vrot.lane.b32.xlu0 %v1138, 95
  %v1301 = vpop.permute.xlu0 %1300
  %1302 = vrot.lane.b32.xlu0 %v1139, 95
  %v1303 = vpop.permute.xlu0 %1302
  %v1304 = vsel %vm505, %v1295, %v1297
  %v1305 = vsel %vm505, %v1297, %v1299
  %v1306 = vsel %vm505, %v1299, %v1301
  %v1307 = vsel %vm505, %v1301, %v1303
  %1313 = vrot.lane.b32.xlu0 %v1174, 94
  %v1314 = vpop.permute.xlu0 %1313
  %1315 = vrot.lane.b32.xlu0 %v1175, 94
  %v1316 = vpop.permute.xlu0 %1315
  %1317 = vrot.lane.b32.xlu0 %v1176, 94
  %v1318 = vpop.permute.xlu0 %1317
  %1319 = vrot.lane.b32.xlu0 %v1177, 94
  %v1320 = vpop.permute.xlu0 %1319
  %1321 = vrot.lane.b32.xlu0 %v1178, 94
  %v1322 = vpop.permute.xlu0 %1321
  %v1323 = vsel %vm525, %v1314, %v1316
  %v1324 = vsel %vm525, %v1316, %v1318
  %v1325 = vsel %vm525, %v1318, %v1320
  %v1326 = vsel %vm525, %v1320, %v1322
  %v1327 = vld [vmem:[%s2] sm:$0xff]
  %1328 = vset.pattern.permute.xlu0 1
  %1329 = vperm.xlu0 %1328, %v31
  %v1330 = vpop.permute.xlu0 %1329
  %1337 = vrot.lane.b32.xlu0 %v896, 17
  %v1338 = vpop.permute.xlu0 %1337
  %1339 = vrot.lane.b32.xlu0 %v897, 17
  %v1340 = vpop.permute.xlu0 %1339
  %1341 = vrot.lane.b32.xlu0 %v898, 17
  %v1342 = vpop.permute.xlu0 %1341
  %1343 = vrot.lane.b32.xlu0 %v899, 17
  %v1344 = vpop.permute.xlu0 %1343
  %1345 = vrot.lane.b32.xlu0 %v900, 17
  %v1346 = vpop.permute.xlu0 %1345
  %1347 = vrot.lane.b32.xlu0 %v1194, 17
  %v1348 = vpop.permute.xlu0 %1347
  %1349 = vrot.lane.b32.xlu0 %v1195, 17
  %v1350 = vpop.permute.xlu0 %1349
  %1351 = vrot.lane.b32.xlu0 %v1196, 17
  %v1352 = vpop.permute.xlu0 %1351
  %1353 = vrot.lane.b32.xlu0 %v1197, 17
  %v1354 = vpop.permute.xlu0 %1353
  %1355 = vrot.lane.b32.xlu0 %v1193, 17
  %v1356 = vpop.permute.xlu0 %1355
  %1357 = vrot.lane.b32.xlu0 %v1213, 17
  %v1358 = vpop.permute.xlu0 %1357
  %1359 = vrot.lane.b32.xlu0 %v1214, 17
  %v1360 = vpop.permute.xlu0 %1359
  %1361 = vrot.lane.b32.xlu0 %v1215, 17
  %v1362 = vpop.permute.xlu0 %1361
  %1363 = vrot.lane.b32.xlu0 %v1216, 17
  %v1364 = vpop.permute.xlu0 %1363
  %1365 = vrot.lane.b32.xlu0 %v1212, 17
  %v1366 = vpop.permute.xlu0 %1365
  %1367 = vrot.lane.b32.xlu0 %v1232, 17
  %v1368 = vpop.permute.xlu0 %1367
  %1369 = vrot.lane.b32.xlu0 %v1233, 17
  %v1370 = vpop.permute.xlu0 %1369
  %1371 = vrot.lane.b32.xlu0 %v1234, 17
  %v1372 = vpop.permute.xlu0 %1371
  %1373 = vrot.lane.b32.xlu0 %v1235, 17
  %v1374 = vpop.permute.xlu0 %1373
  %1375 = vrot.lane.b32.xlu0 %v1231, 17
  %v1376 = vpop.permute.xlu0 %1375
  %1377 = vrot.lane.b32.xlu0 %v1241, 17
  %v1378 = vpop.permute.xlu0 %1377
  %1379 = vrot.lane.b32.xlu0 %v1248, 17
  %v1380 = vpop.permute.xlu0 %1379
  %1381 = vrot.lane.b32.xlu0 %v1249, 17
  %v1382 = vpop.permute.xlu0 %1381
  %1383 = vrot.lane.b32.xlu0 %v1250, 17
  %v1384 = vpop.permute.xlu0 %1383
  %1385 = vrot.lane.b32.xlu0 %v1247, 17
  %v1386 = vpop.permute.xlu0 %1385
  %1387 = vrot.lane.b32.xlu0 %v1257, 17
  %v1388 = vpop.permute.xlu0 %1387
  %1389 = vrot.lane.b32.xlu0 %v1266, 17
  %v1390 = vpop.permute.xlu0 %1389
  %1391 = vrot.lane.b32.xlu0 %v1267, 17
  %v1392 = vpop.permute.xlu0 %1391
  %1393 = vrot.lane.b32.xlu0 %v1268, 17
  %v1394 = vpop.permute.xlu0 %1393
  %1395 = vrot.lane.b32.xlu0 %v1269, 17
  %v1396 = vpop.permute.xlu0 %1395
  %1397 = vrot.lane.b32.xlu0 %v1276, 17
  %v1398 = vpop.permute.xlu0 %1397
  %1399 = vrot.lane.b32.xlu0 %v1285, 17
  %v1400 = vpop.permute.xlu0 %1399
  %1401 = vrot.lane.b32.xlu0 %v1286, 17
  %v1402 = vpop.permute.xlu0 %1401
  %1403 = vrot.lane.b32.xlu0 %v1287, 17
  %v1404 = vpop.permute.xlu0 %1403
  %1405 = vrot.lane.b32.xlu0 %v1288, 17
  %v1406 = vpop.permute.xlu0 %1405
  %1407 = vrot.lane.b32.xlu0 %v1295, 17
  %v1408 = vpop.permute.xlu0 %1407
  %1409 = vrot.lane.b32.xlu0 %v1304, 17
  %v1410 = vpop.permute.xlu0 %1409
  %1411 = vrot.lane.b32.xlu0 %v1305, 17
  %v1412 = vpop.permute.xlu0 %1411
  %1413 = vrot.lane.b32.xlu0 %v1306, 17
  %v1414 = vpop.permute.xlu0 %1413
  %1415 = vrot.lane.b32.xlu0 %v1307, 17
  %v1416 = vpop.permute.xlu0 %1415
  %1417 = vrot.lane.b32.xlu0 %v1314, 17
  %v1418 = vpop.permute.xlu0 %1417
  %1419 = vrot.lane.b32.xlu0 %v1323, 17
  %v1420 = vpop.permute.xlu0 %1419
  %1421 = vrot.lane.b32.xlu0 %v1324, 17
  %v1422 = vpop.permute.xlu0 %1421
  %1423 = vrot.lane.b32.xlu0 %v1325, 17
  %v1424 = vpop.permute.xlu0 %1423
  %1425 = vrot.lane.b32.xlu0 %v1326, 17
  %v1426 = vpop.permute.xlu0 %1425
  %v1427 = vsel %vm363, %v1338, %v1340
  %v1428 = vsel %vm363, %v1340, %v1342
  %v1429 = vsel %vm363, %v1342, %v1344
  %v1430 = vsel %vm363, %v1344, %v1346
  %v1431 = vsel %vm363, %v1348, %v1350
  %v1432 = vsel %vm363, %v1350, %v1352
  %v1433 = vsel %vm363, %v1352, %v1354
  %v1434 = vsel %vm363, %v1354, %v1356
  %v1435 = vsel %vm363, %v1358, %v1360
  %v1436 = vsel %vm363, %v1360, %v1362
  %v1437 = vsel %vm363, %v1362, %v1364
  %v1438 = vsel %vm363, %v1364, %v1366
  %v1439 = vsel %vm363, %v1368, %v1370
  %v1440 = vsel %vm363, %v1370, %v1372
  %v1441 = vsel %vm363, %v1372, %v1374
  %v1442 = vsel %vm363, %v1374, %v1376
  %v1443 = vsel %vm363, %v1378, %v1380
  %v1444 = vsel %vm363, %v1380, %v1382
  %v1445 = vsel %vm363, %v1382, %v1384
  %v1446 = vsel %vm363, %v1384, %v1386
  %v1447 = vsel %vm363, %v1388, %v1390
  %v1448 = vsel %vm363, %v1390, %v1392
  %v1449 = vsel %vm363, %v1392, %v1394
  %v1450 = vsel %vm363, %v1394, %v1396
  %v1451 = vsel %vm363, %v1398, %v1400
  %v1452 = vsel %vm363, %v1400, %v1402
  %v1453 = vsel %vm363, %v1402, %v1404
  %v1454 = vsel %vm363, %v1404, %v1406
  %v1455 = vsel %vm363, %v1408, %v1410
  %v1456 = vsel %vm363, %v1410, %v1412
  %v1457 = vsel %vm363, %v1412, %v1414
  %v1458 = vsel %vm363, %v1414, %v1416
  %v1459 = vsel %vm363, %v1418, %v1420
  %v1460 = vsel %vm363, %v1420, %v1422
  %v1461 = vsel %vm363, %v1422, %v1424
  %v1462 = vsel %vm363, %v1424, %v1426
  %v1500 = vsel %vm703, %v1327, 0
  %1502 = vmatprep.subr.mxu0 %v1428
  %1503 = vmatpush1.msra.mxu0 %v1427
  %1504 = vmatprep.subr.mxu0 %v1432
  %1505 = vmatpush1.msra.mxu0 %v1431
  %1506 = vmatprep.subr.mxu0 %v1436
  %1507 = vmatpush1.msra.mxu0 %v1435
  %1508 = vmatprep.subr.mxu0 %v1440
  %1509 = vmatpush1.msra.mxu0 %v1439
  %1510 = vmatprep.subr.mxu0 %v1444
  %1511 = vmatpush1.msra.mxu0 %v1443
  %1512 = vmatprep.subr.mxu0 %v1448
  %1513 = vmatpush1.msra.mxu0 %v1447
  %1514 = vmatprep.subr.mxu0 %v1452
  %1515 = vmatpush1.msra.mxu0 %v1451
  %1516 = vmatprep.subr.mxu0 %v1456
  %1517 = vmatpush1.msra.mxu0 %v1455
  %1518 = vmatprep.subr.mxu0 %v1460
  %1519 = vmatpush1.msra.mxu0 %v1459
  %1520 = vmatprep.subr.mxu0 0.0
  %1521 = vmatpush1.msra.mxu0 0.0
  %1522 = vmatprep.subr.mxu0 0.0
  %1523 = vmatpush1.msra.mxu0 0.0
  %1524 = vmatprep.subr.mxu0 0.0
  %1525 = vmatpush1.msra.mxu0 0.0
  %1526 = vmatprep.subr.mxu0 0.0
  %1527 = vmatpush1.msra.mxu0 0.0
  %1528 = vmatprep.subr.mxu0 0.0
  %1529 = vmatpush1.msra.mxu0 0.0
  %1530 = vmatprep.subr.mxu0 0.0
  %1531 = vmatpush1.msra.mxu0 0.0
  %1532 = vmatprep.subr.mxu0 0.0
  %1533 = vmatpush1.msra.mxu0 0.0
  %1534 = vmatprep.subr.mxu0 0.0
  %1535 = vmatpush1.msra.mxu0 0.0
  %1536 = vmatprep.subr.mxu0 0.0
  %1537 = vmatpush1.msra.mxu0 0.0
  %1538 = vmatprep.subr.mxu0 0.0
  %1539 = vmatpush1.msra.mxu0 0.0
  %1540 = vmatprep.subr.mxu0 0.0
  %1541 = vmatpush1.msra.mxu0 0.0
  %1542 = vmatprep.subr.mxu0 0.0
  %1543 = vmatpush1.msra.mxu0 0.0
  %1544 = vmatprep.subr.mxu0 0.0
  %1545 = vmatpush1.msra.mxu0 0.0
  %1546 = vmatprep.subr.mxu0 0.0
  %1547 = vmatpush1.msra.mxu0 0.0
  %1548 = vmatprep.subr.mxu0 0.0
  %1549 = vmatpush1.msra.mxu0 0.0
  %1550 = vmatprep.subr.mxu0 0.0
  %1551 = vmatpush1.msra.mxu0 0.0
  %1552 = vmatprep.subr.mxu0 0.0
  %1553 = vmatpush1.msra.mxu0 0.0
  %1554 = vmatprep.subr.mxu0 0.0
  %1555 = vmatpush1.msra.mxu0 0.0
  %1556 = vmatprep.subr.mxu0 0.0
  %1557 = vmatpush1.msra.mxu0 0.0
  %1558 = vmatprep.subr.mxu0 0.0
  %1559 = vmatpush1.msra.mxu0 0.0
  %1560 = vmatprep.subr.mxu0 0.0
  %1561 = vmatpush1.msra.mxu0 0.0
  %1562 = vmatprep.subr.mxu0 0.0
  %1563 = vmatpush1.msra.mxu0 0.0
  %1564 = vmatprep.subr.mxu0 0.0
  %1565 = vmatpush1.msra.mxu0 0.0
  %1566 = vmatprep.mubr.f32.mxu0 0.0
  %1567 = vmatmul.mubr.f32.gmra.mrb[0].mxu0 %v1500
  %v1568 = vpop.f32.mrb[0].mxu0
  %v1569 = vadd.f32 %v1330, %v1568
  %v1570 = vpop.f32.mrb[0].mxu0
  %v1571 = vadd.f32 %v1330, %v1570
  %1572 = vdwg.mxu0
  %1573 = vmatprep.subr.mxu0 %v1430
  %1574 = vmatpush1.msra.mxu0 %v1429
  %1575 = vmatprep.subr.mxu0 %v1434
  %1576 = vmatpush1.msra.mxu0 %v1433
  %1577 = vmatprep.subr.mxu0 %v1438
  %1578 = vmatpush1.msra.mxu0 %v1437
  %1579 = vmatprep.subr.mxu0 %v1442
  %1580 = vmatpush1.msra.mxu0 %v1441
  %1581 = vmatprep.subr.mxu0 %v1446
  %1582 = vmatpush1.msra.mxu0 %v1445
  %1583 = vmatprep.subr.mxu0 %v1450
  %1584 = vmatpush1.msra.mxu0 %v1449
  %1585 = vmatprep.subr.mxu0 %v1454
  %1586 = vmatpush1.msra.mxu0 %v1453
  %1587 = vmatprep.subr.mxu0 %v1458
  %1588 = vmatpush1.msra.mxu0 %v1457
  %1589 = vmatprep.subr.mxu0 %v1462
  %1590 = vmatpush1.msra.mxu0 %v1461
  %1591 = vmatprep.subr.mxu0 0.0
  %1592 = vmatpush1.msra.mxu0 0.0
  %1593 = vmatprep.subr.mxu0 0.0
  %1594 = vmatpush1.msra.mxu0 0.0
  %1595 = vmatprep.subr.mxu0 0.0
  %1596 = vmatpush1.msra.mxu0 0.0
  %1597 = vmatprep.subr.mxu0 0.0
  %1598 = vmatpush1.msra.mxu0 0.0
  %1599 = vmatprep.subr.mxu0 0.0
  %1600 = vmatpush1.msra.mxu0 0.0
  %1601 = vmatprep.subr.mxu0 0.0
  %1602 = vmatpush1.msra.mxu0 0.0
  %1603 = vmatprep.subr.mxu0 0.0
  %1604 = vmatpush1.msra.mxu0 0.0
  %1605 = vmatprep.subr.mxu0 0.0
  %1606 = vmatpush1.msra.mxu0 0.0
  %1607 = vmatprep.subr.mxu0 0.0
  %1608 = vmatpush1.msra.mxu0 0.0
  %1609 = vmatprep.subr.mxu0 0.0
  %1610 = vmatpush1.msra.mxu0 0.0
  %1611 = vmatprep.subr.mxu0 0.0
  %1612 = vmatpush1.msra.mxu0 0.0
  %1613 = vmatprep.subr.mxu0 0.0
  %1614 = vmatpush1.msra.mxu0 0.0
  %1615 = vmatprep.subr.mxu0 0.0
  %1616 = vmatpush1.msra.mxu0 0.0
  %1617 = vmatprep.subr.mxu0 0.0
  %1618 = vmatpush1.msra.mxu0 0.0
  %1619 = vmatprep.subr.mxu0 0.0
  %1620 = vmatpush1.msra.mxu0 0.0
  %1621 = vmatprep.subr.mxu0 0.0
  %1622 = vmatpush1.msra.mxu0 0.0
  %1623 = vmatprep.subr.mxu0 0.0
  %1624 = vmatpush1.msra.mxu0 0.0
  %1625 = vmatprep.subr.mxu0 0.0
  %1626 = vmatpush1.msra.mxu0 0.0
  %1627 = vmatprep.subr.mxu0 0.0
  %1628 = vmatpush1.msra.mxu0 0.0
  %1629 = vmatprep.subr.mxu0 0.0
  %1630 = vmatpush1.msra.mxu0 0.0
  %1631 = vmatprep.subr.mxu0 0.0
  %1632 = vmatpush1.msra.mxu0 0.0
  %1633 = vmatprep.subr.mxu0 0.0
  %1634 = vmatpush1.msra.mxu0 0.0
  %1635 = vmatprep.subr.mxu0 0.0
  %1636 = vmatpush1.msra.mxu0 0.0
  %1637 = vmatprep.mubr.f32.mxu0 0.0
  %1638 = vmatmul.mubr.f32.gmra.mrb[0].mxu0 %v1500
  %v1639 = vpop.f32.mrb[0].mxu0
  %v1640 = vadd.f32 %v1330, %v1639
  %v1641 = vpop.f32.mrb[0].mxu0
  %v1642 = vadd.f32 %v1330, %v1641
  %1643 = vdwg.mxu0
  %v1644 = vmax.f32 %v1569, 0.0
  %v1645 = vmax.f32 %v1571, 0.0
  %v1646 = vmax.f32 %v1640, 0.0
  %v1647 = vmax.f32 %v1642, 0.0
  %1648 = vst [vmem:[#allocation2 + $0x8] sm:$0xff] %v1644
  %1649 = vst [vmem:[#allocation2 + $0x10] sm:$0xff] %v1645
  %1650 = vst [vmem:[#allocation2 + $0x18] sm:$0xff] %v1646
  %1651 = vst [vmem:[#allocation2 + $0x20] sm:$0xff] %v1647
  %v1652 = vld [vmem:[#allocation2] sm:$0xff]
  %v1653 = vld [vmem:[#allocation2 + $0x8] sm:$0xff]
  %v1654 = vld [vmem:[#allocation2 + $0x10] sm:$0xff]
  %v1655 = vld [vmem:[#allocation2 + $0x18] sm:$0xff]
  %v1656 = vld [vmem:[#allocation2 + $0x20] sm:$0xff]
  %v1657 = vld [vmem:[%s6] ss:$8 sm:$0xf]
  %v1659 = vlaneseq
  %v1660 = vshrl.u32 %v1659, 7
  %v1661 = vsub.s32 0, %v1660
  %v1662 = vrot.slane %v1657, %v1661
  %v1663 = vlaneseq
  %v1664 = vshrl.u32 %v1663, 7
  %v1665 = vsub.s32 1, %v1664
  %v1666 = vrot.slane %v1657, %v1665
  %v1667 = vlaneseq
  %v1668 = vshrl.u32 %v1667, 7
  %v1669 = vsub.s32 2, %v1668
  %v1670 = vrot.slane %v1657, %v1669
  %v1671 = vlaneseq
  %v1672 = vshrl.u32 %v1671, 7
  %v1673 = vsub.s32 3, %v1672
  %v1674 = vrot.slane %v1657, %v1673
  %1675 = vrot.lane.b32.xlu0 %v1662, 111
  %v1676 = vpop.permute.xlu0 %1675
  %1677 = vrot.lane.b32.xlu0 %v1666, 111
  %v1678 = vpop.permute.xlu0 %1677
  %1679 = vrot.lane.b32.xlu0 %v1670, 111
  %v1680 = vpop.permute.xlu0 %1679
  %1681 = vrot.lane.b32.xlu0 %v1674, 111
  %v1682 = vpop.permute.xlu0 %1681
  %v1683 = vsel %vm71, %v1676, %v1678
  %v1684 = vsel %vm71, %v1678, %v1680
  %v1685 = vsel %vm71, %v1680, %v1682
  %v1691 = vmul.f32 %v1652, %v1676
  %v1692 = vmul.f32 %v1653, %v1683
  %v1693 = vmul.f32 %v1654, %v1684
  %v1694 = vmul.f32 %v1655, %v1685
  %v1695 = vmul.f32 %v1656, %v1682
  %v1696 = vld [vmem:[%s85] ss:$8 sm:$0xf]
  %v1698 = vlaneseq
  %v1699 = vshrl.u32 %v1698, 7
  %v1700 = vsub.s32 0, %v1699
  %v1701 = vrot.slane %v1696, %v1700
  %v1702 = vlaneseq
  %v1703 = vshrl.u32 %v1702, 7
  %v1704 = vsub.s32 1, %v1703
  %v1705 = vrot.slane %v1696, %v1704
  %v1706 = vlaneseq
  %v1707 = vshrl.u32 %v1706, 7
  %v1708 = vsub.s32 2, %v1707
  %v1709 = vrot.slane %v1696, %v1708
  %v1710 = vlaneseq
  %v1711 = vshrl.u32 %v1710, 7
  %v1712 = vsub.s32 3, %v1711
  %v1713 = vrot.slane %v1696, %v1712
  %1714 = vrot.lane.b32.xlu0 %v1701, 112
  %v1715 = vpop.permute.xlu0 %1714
  %1716 = vrot.lane.b32.xlu0 %v1705, 112
  %v1717 = vpop.permute.xlu0 %1716
  %1718 = vrot.lane.b32.xlu0 %v1709, 112
  %v1719 = vpop.permute.xlu0 %1718
  %1720 = vrot.lane.b32.xlu0 %v1713, 112
  %v1721 = vpop.permute.xlu0 %1720
  %v1722 = vsel %vm112, %v1715, %v1717
  %v1723 = vsel %vm112, %v1717, %v1719
  %v1724 = vsel %vm112, %v1719, %v1721
  %v1730 = vmul.f32 %v1652, %v1715
  %v1731 = vmul.f32 %v1653, %v1722
  %v1732 = vmul.f32 %v1654, %v1723
  %v1733 = vmul.f32 %v1655, %v1724
  %v1734 = vmul.f32 %v1656, %v1721
  %v1735 = vld [vmem:[%s126] ss:$8 sm:$0xf]
  %v1737 = vlaneseq
  %v1738 = vshrl.u32 %v1737, 7
  %v1739 = vsub.s32 0, %v1738
  %v1740 = vrot.slane %v1735, %v1739
  %v1741 = vlaneseq
  %v1742 = vshrl.u32 %v1741, 7
  %v1743 = vsub.s32 1, %v1742
  %v1744 = vrot.slane %v1735, %v1743
  %v1745 = vlaneseq
  %v1746 = vshrl.u32 %v1745, 7
  %v1747 = vsub.s32 2, %v1746
  %v1748 = vrot.slane %v1735, %v1747
  %v1749 = vlaneseq
  %v1750 = vshrl.u32 %v1749, 7
  %v1751 = vsub.s32 3, %v1750
  %v1752 = vrot.slane %v1735, %v1751
  %1753 = vrot.lane.b32.xlu0 %v1740, 113
  %v1754 = vpop.permute.xlu0 %1753
  %1755 = vrot.lane.b32.xlu0 %v1744, 113
  %v1756 = vpop.permute.xlu0 %1755
  %1757 = vrot.lane.b32.xlu0 %v1748, 113
  %v1758 = vpop.permute.xlu0 %1757
  %1759 = vrot.lane.b32.xlu0 %v1752, 113
  %v1760 = vpop.permute.xlu0 %1759
  %v1761 = vsel %vm153, %v1754, %v1756
  %v1762 = vsel %vm153, %v1756, %v1758
  %v1763 = vsel %vm153, %v1758, %v1760
  %v1769 = vmul.f32 %v1652, %v1754
  %v1770 = vmul.f32 %v1653, %v1761
  %v1771 = vmul.f32 %v1654, %v1762
  %v1772 = vmul.f32 %v1655, %v1763
  %v1773 = vmul.f32 %v1656, %v1760
  %v1774 = vld [vmem:[%s167] ss:$8 sm:$0xf]
  %v1776 = vlaneseq
  %v1777 = vshrl.u32 %v1776, 7
  %v1778 = vsub.s32 0, %v1777
  %v1779 = vrot.slane %v1774, %v1778
  %v1780 = vlaneseq
  %v1781 = vshrl.u32 %v1780, 7
  %v1782 = vsub.s32 1, %v1781
  %v1783 = vrot.slane %v1774, %v1782
  %v1784 = vlaneseq
  %v1785 = vshrl.u32 %v1784, 7
  %v1786 = vsub.s32 2, %v1785
  %v1787 = vrot.slane %v1774, %v1786
  %v1788 = vlaneseq
  %v1789 = vshrl.u32 %v1788, 7
  %v1790 = vsub.s32 3, %v1789
  %v1791 = vrot.slane %v1774, %v1790
  %1792 = vrot.lane.b32.xlu0 %v1779, 127
  %v1793 = vpop.permute.xlu0 %1792
  %1794 = vrot.lane.b32.xlu0 %v1783, 127
  %v1795 = vpop.permute.xlu0 %1794
  %1796 = vrot.lane.b32.xlu0 %v1787, 127
  %v1797 = vpop.permute.xlu0 %1796
  %1798 = vrot.lane.b32.xlu0 %v1791, 127
  %v1799 = vpop.permute.xlu0 %1798
  %v1800 = vsel %vm194, %v1793, %v1795
  %v1801 = vsel %vm194, %v1795, %v1797
  %v1802 = vsel %vm194, %v1797, %v1799
  %v1808 = vmul.f32 %v1652, %v1793
  %v1809 = vmul.f32 %v1653, %v1800
  %v1810 = vmul.f32 %v1654, %v1801
  %v1811 = vmul.f32 %v1655, %v1802
  %v1812 = vmul.f32 %v1656, %v1799
  %v1813 = vld [vmem:[#allocation2 + $0x8] sm:$0xff]
  %v1814 = vld [vmem:[#allocation2 + $0x10] sm:$0xff]
  %v1815 = vld [vmem:[#allocation2 + $0x18] sm:$0xff]
  %v1816 = vld [vmem:[#allocation2 + $0x20] sm:$0xff]
  %v1817 = vld [vmem:[#allocation2 + $0x28] sm:$0xff]
  %v1818 = vld [vmem:[%s213] ss:$8 sm:$0xf]
  %v1820 = vlaneseq
  %v1821 = vshrl.u32 %v1820, 7
  %v1822 = vsub.s32 0, %v1821
  %v1823 = vrot.slane %v1818, %v1822
  %v1824 = vlaneseq
  %v1825 = vshrl.u32 %v1824, 7
  %v1826 = vsub.s32 1, %v1825
  %v1827 = vrot.slane %v1818, %v1826
  %v1828 = vlaneseq
  %v1829 = vshrl.u32 %v1828, 7
  %v1830 = vsub.s32 2, %v1829
  %v1831 = vrot.slane %v1818, %v1830
  %v1832 = vlaneseq
  %v1833 = vshrl.u32 %v1832, 7
  %v1834 = vsub.s32 3, %v1833
  %v1835 = vrot.slane %v1818, %v1834
  %1836 = vrot.lane.b32.xlu0 %v1823, 1
  %v1837 = vpop.permute.xlu0 %1836
  %1838 = vrot.lane.b32.xlu0 %v1827, 1
  %v1839 = vpop.permute.xlu0 %1838
  %1840 = vrot.lane.b32.xlu0 %v1831, 1
  %v1841 = vpop.permute.xlu0 %1840
  %1842 = vrot.lane.b32.xlu0 %v1835, 1
  %v1843 = vpop.permute.xlu0 %1842
  %v1844 = vsel %vm240, %v1837, %v1839
  %v1845 = vsel %vm240, %v1839, %v1841
  %v1846 = vsel %vm240, %v1841, %v1843
  %v1852 = vmul.f32 %v1813, %v1837
  %v1853 = vmul.f32 %v1814, %v1844
  %v1854 = vmul.f32 %v1815, %v1845
  %v1855 = vmul.f32 %v1816, %v1846
  %v1856 = vmul.f32 %v1817, %v1843
  %v1857 = vld [vmem:[%s254] ss:$8 sm:$0xf]
  %v1859 = vlaneseq
  %v1860 = vshrl.u32 %v1859, 7
  %v1861 = vsub.s32 0, %v1860
  %v1862 = vrot.slane %v1857, %v1861
  %v1863 = vlaneseq
  %v1864 = vshrl.u32 %v1863, 7
  %v1865 = vsub.s32 1, %v1864
  %v1866 = vrot.slane %v1857, %v1865
  %v1867 = vlaneseq
  %v1868 = vshrl.u32 %v1867, 7
  %v1869 = vsub.s32 2, %v1868
  %v1870 = vrot.slane %v1857, %v1869
  %v1871 = vlaneseq
  %v1872 = vshrl.u32 %v1871, 7
  %v1873 = vsub.s32 3, %v1872
  %v1874 = vrot.slane %v1857, %v1873
  %1875 = vrot.lane.b32.xlu0 %v1862, 15
  %v1876 = vpop.permute.xlu0 %1875
  %1877 = vrot.lane.b32.xlu0 %v1866, 15
  %v1878 = vpop.permute.xlu0 %1877
  %1879 = vrot.lane.b32.xlu0 %v1870, 15
  %v1880 = vpop.permute.xlu0 %1879
  %1881 = vrot.lane.b32.xlu0 %v1874, 15
  %v1882 = vpop.permute.xlu0 %1881
  %v1883 = vsel %vm281, %v1876, %v1878
  %v1884 = vsel %vm281, %v1878, %v1880
  %v1885 = vsel %vm281, %v1880, %v1882
  %v1891 = vmul.f32 %v1813, %v1876
  %v1892 = vmul.f32 %v1814, %v1883
  %v1893 = vmul.f32 %v1815, %v1884
  %v1894 = vmul.f32 %v1816, %v1885
  %v1895 = vmul.f32 %v1817, %v1882
  %v1896 = vld [vmem:[%s295] ss:$8 sm:$0xf]
  %v1898 = vlaneseq
  %v1899 = vshrl.u32 %v1898, 7
  %v1900 = vsub.s32 0, %v1899
  %v1901 = vrot.slane %v1896, %v1900
  %v1902 = vlaneseq
  %v1903 = vshrl.u32 %v1902, 7
  %v1904 = vsub.s32 1, %v1903
  %v1905 = vrot.slane %v1896, %v1904
  %v1906 = vlaneseq
  %v1907 = vshrl.u32 %v1906, 7
  %v1908 = vsub.s32 2, %v1907
  %v1909 = vrot.slane %v1896, %v1908
  %v1910 = vlaneseq
  %v1911 = vshrl.u32 %v1910, 7
  %v1912 = vsub.s32 3, %v1911
  %v1913 = vrot.slane %v1896, %v1912
  %1914 = vrot.lane.b32.xlu0 %v1901, 16
  %v1915 = vpop.permute.xlu0 %1914
  %1916 = vrot.lane.b32.xlu0 %v1905, 16
  %v1917 = vpop.permute.xlu0 %1916
  %1918 = vrot.lane.b32.xlu0 %v1909, 16
  %v1919 = vpop.permute.xlu0 %1918
  %1920 = vrot.lane.b32.xlu0 %v1913, 16
  %v1921 = vpop.permute.xlu0 %1920
  %v1922 = vsel %vm322, %v1915, %v1917
  %v1923 = vsel %vm322, %v1917, %v1919
  %v1924 = vsel %vm322, %v1919, %v1921
  %v1930 = vmul.f32 %v1813, %v1915
  %v1931 = vmul.f32 %v1814, %v1922
  %v1932 = vmul.f32 %v1815, %v1923
  %v1933 = vmul.f32 %v1816, %v1924
  %v1934 = vmul.f32 %v1817, %v1921
  %v1935 = vld [vmem:[%s336] ss:$8 sm:$0xf]
  %v1937 = vlaneseq
  %v1938 = vshrl.u32 %v1937, 7
  %v1939 = vsub.s32 0, %v1938
  %v1940 = vrot.slane %v1935, %v1939
  %v1941 = vlaneseq
  %v1942 = vshrl.u32 %v1941, 7
  %v1943 = vsub.s32 1, %v1942
  %v1944 = vrot.slane %v1935, %v1943
  %v1945 = vlaneseq
  %v1946 = vshrl.u32 %v1945, 7
  %v1947 = vsub.s32 2, %v1946
  %v1948 = vrot.slane %v1935, %v1947
  %v1949 = vlaneseq
  %v1950 = vshrl.u32 %v1949, 7
  %v1951 = vsub.s32 3, %v1950
  %v1952 = vrot.slane %v1935, %v1951
  %1953 = vrot.lane.b32.xlu0 %v1940, 17
  %v1954 = vpop.permute.xlu0 %1953
  %1955 = vrot.lane.b32.xlu0 %v1944, 17
  %v1956 = vpop.permute.xlu0 %1955
  %1957 = vrot.lane.b32.xlu0 %v1948, 17
  %v1958 = vpop.permute.xlu0 %1957
  %1959 = vrot.lane.b32.xlu0 %v1952, 17
  %v1960 = vpop.permute.xlu0 %1959
  %v1961 = vsel %vm363, %v1954, %v1956
  %v1962 = vsel %vm363, %v1956, %v1958
  %v1963 = vsel %vm363, %v1958, %v1960
  %v1969 = vmul.f32 %v1813, %v1954
  %v1970 = vmul.f32 %v1814, %v1961
  %v1971 = vmul.f32 %v1815, %v1962
  %v1972 = vmul.f32 %v1816, %v1963
  %v1973 = vmul.f32 %v1817, %v1960
  %1979 = vrot.lane.b32.xlu0 %v1730, 127
  %v1980 = vpop.permute.xlu0 %1979
  %1981 = vrot.lane.b32.xlu0 %v1731, 127
  %v1982 = vpop.permute.xlu0 %1981
  %1983 = vrot.lane.b32.xlu0 %v1732, 127
  %v1984 = vpop.permute.xlu0 %1983
  %1985 = vrot.lane.b32.xlu0 %v1733, 127
  %v1986 = vpop.permute.xlu0 %1985
  %1987 = vrot.lane.b32.xlu0 %v1734, 127
  %v1988 = vpop.permute.xlu0 %1987
  %v1989 = vsel %vm194, %v1980, %v1982
  %v1990 = vsel %vm194, %v1982, %v1984
  %v1991 = vsel %vm194, %v1984, %v1986
  %v1992 = vsel %vm194, %v1986, %v1988
  %1998 = vrot.lane.b32.xlu0 %v1769, 126
  %v1999 = vpop.permute.xlu0 %1998
  %2000 = vrot.lane.b32.xlu0 %v1770, 126
  %v2001 = vpop.permute.xlu0 %2000
  %2002 = vrot.lane.b32.xlu0 %v1771, 126
  %v2003 = vpop.permute.xlu0 %2002
  %2004 = vrot.lane.b32.xlu0 %v1772, 126
  %v2005 = vpop.permute.xlu0 %2004
  %2006 = vrot.lane.b32.xlu0 %v1773, 126
  %v2007 = vpop.permute.xlu0 %2006
  %v2008 = vsel %vm411, %v1999, %v2001
  %v2009 = vsel %vm411, %v2001, %v2003
  %v2010 = vsel %vm411, %v2003, %v2005
  %v2011 = vsel %vm411, %v2005, %v2007
  %2017 = vrot.lane.b32.xlu0 %v1808, 112
  %v2018 = vpop.permute.xlu0 %2017
  %2019 = vrot.lane.b32.xlu0 %v1809, 112
  %v2020 = vpop.permute.xlu0 %2019
  %2021 = vrot.lane.b32.xlu0 %v1810, 112
  %v2022 = vpop.permute.xlu0 %2021
  %2023 = vrot.lane.b32.xlu0 %v1811, 112
  %v2024 = vpop.permute.xlu0 %2023
  %2025 = vrot.lane.b32.xlu0 %v1812, 112
  %v2026 = vpop.permute.xlu0 %2025
  %v2027 = vsel %vm112, %v2018, %v2020
  %v2028 = vsel %vm112, %v2020, %v2022
  %v2029 = vsel %vm112, %v2022, %v2024
  %v2030 = vsel %vm112, %v2024, %v2026
  %2035 = vrot.lane.b32.xlu0 %v1653, 111
  %v2036 = vpop.permute.xlu0 %2035
  %2037 = vrot.lane.b32.xlu0 %v1654, 111
  %v2038 = vpop.permute.xlu0 %2037
  %2039 = vrot.lane.b32.xlu0 %v1655, 111
  %v2040 = vpop.permute.xlu0 %2039
  %2041 = vrot.lane.b32.xlu0 %v1656, 111
  %v2042 = vpop.permute.xlu0 %2041
  %v2043 = vsel %vm71, %v2036, %v2038
  %v2044 = vsel %vm71, %v2038, %v2040
  %v2045 = vsel %vm71, %v2040, %v2042
  %2051 = vrot.lane.b32.xlu0 %v1852, 110
  %v2052 = vpop.permute.xlu0 %2051
  %2053 = vrot.lane.b32.xlu0 %v1853, 110
  %v2054 = vpop.permute.xlu0 %2053
  %2055 = vrot.lane.b32.xlu0 %v1854, 110
  %v2056 = vpop.permute.xlu0 %2055
  %2057 = vrot.lane.b32.xlu0 %v1855, 110
  %v2058 = vpop.permute.xlu0 %2057
  %2059 = vrot.lane.b32.xlu0 %v1856, 110
  %v2060 = vpop.permute.xlu0 %2059
  %v2061 = vsel %vm465, %v2052, %v2054
  %v2062 = vsel %vm465, %v2054, %v2056
  %v2063 = vsel %vm465, %v2056, %v2058
  %v2064 = vsel %vm465, %v2058, %v2060
  %2070 = vrot.lane.b32.xlu0 %v1891, 96
  %v2071 = vpop.permute.xlu0 %2070
  %2072 = vrot.lane.b32.xlu0 %v1892, 96
  %v2073 = vpop.permute.xlu0 %2072
  %2074 = vrot.lane.b32.xlu0 %v1893, 96
  %v2075 = vpop.permute.xlu0 %2074
  %2076 = vrot.lane.b32.xlu0 %v1894, 96
  %v2077 = vpop.permute.xlu0 %2076
  %2078 = vrot.lane.b32.xlu0 %v1895, 96
  %v2079 = vpop.permute.xlu0 %2078
  %v2080 = vsel %vm485, %v2071, %v2073
  %v2081 = vsel %vm485, %v2073, %v2075
  %v2082 = vsel %vm485, %v2075, %v2077
  %v2083 = vsel %vm485, %v2077, %v2079
  %2089 = vrot.lane.b32.xlu0 %v1930, 95
  %v2090 = vpop.permute.xlu0 %2089
  %2091 = vrot.lane.b32.xlu0 %v1931, 95
  %v2092 = vpop.permute.xlu0 %2091
  %2093 = vrot.lane.b32.xlu0 %v1932, 95
  %v2094 = vpop.permute.xlu0 %2093
  %2095 = vrot.lane.b32.xlu0 %v1933, 95
  %v2096 = vpop.permute.xlu0 %2095
  %2097 = vrot.lane.b32.xlu0 %v1934, 95
  %v2098 = vpop.permute.xlu0 %2097
  %v2099 = vsel %vm505, %v2090, %v2092
  %v2100 = vsel %vm505, %v2092, %v2094
  %v2101 = vsel %vm505, %v2094, %v2096
  %v2102 = vsel %vm505, %v2096, %v2098
  %2108 = vrot.lane.b32.xlu0 %v1969, 94
  %v2109 = vpop.permute.xlu0 %2108
  %2110 = vrot.lane.b32.xlu0 %v1970, 94
  %v2111 = vpop.permute.xlu0 %2110
  %2112 = vrot.lane.b32.xlu0 %v1971, 94
  %v2113 = vpop.permute.xlu0 %2112
  %2114 = vrot.lane.b32.xlu0 %v1972, 94
  %v2115 = vpop.permute.xlu0 %2114
  %2116 = vrot.lane.b32.xlu0 %v1973, 94
  %v2117 = vpop.permute.xlu0 %2116
  %v2118 = vsel %vm525, %v2109, %v2111
  %v2119 = vsel %vm525, %v2111, %v2113
  %v2120 = vsel %vm525, %v2113, %v2115
  %v2121 = vsel %vm525, %v2115, %v2117
  %v2122 = vld [vmem:[%s3] sm:$0xff]
  %2123 = vset.pattern.permute.xlu0 2
  %2124 = vperm.xlu0 %2123, %v31
  %v2125 = vpop.permute.xlu0 %2124
  %2132 = vrot.lane.b32.xlu0 %v1691, 17
  %v2133 = vpop.permute.xlu0 %2132
  %2134 = vrot.lane.b32.xlu0 %v1692, 17
  %v2135 = vpop.permute.xlu0 %2134
  %2136 = vrot.lane.b32.xlu0 %v1693, 17
  %v2137 = vpop.permute.xlu0 %2136
  %2138 = vrot.lane.b32.xlu0 %v1694, 17
  %v2139 = vpop.permute.xlu0 %2138
  %2140 = vrot.lane.b32.xlu0 %v1695, 17
  %v2141 = vpop.permute.xlu0 %2140
  %2142 = vrot.lane.b32.xlu0 %v1989, 17
  %v2143 = vpop.permute.xlu0 %2142
  %2144 = vrot.lane.b32.xlu0 %v1990, 17
  %v2145 = vpop.permute.xlu0 %2144
  %2146 = vrot.lane.b32.xlu0 %v1991, 17
  %v2147 = vpop.permute.xlu0 %2146
  %2148 = vrot.lane.b32.xlu0 %v1992, 17
  %v2149 = vpop.permute.xlu0 %2148
  %2150 = vrot.lane.b32.xlu0 %v1988, 17
  %v2151 = vpop.permute.xlu0 %2150
  %2152 = vrot.lane.b32.xlu0 %v2008, 17
  %v2153 = vpop.permute.xlu0 %2152
  %2154 = vrot.lane.b32.xlu0 %v2009, 17
  %v2155 = vpop.permute.xlu0 %2154
  %2156 = vrot.lane.b32.xlu0 %v2010, 17
  %v2157 = vpop.permute.xlu0 %2156
  %2158 = vrot.lane.b32.xlu0 %v2011, 17
  %v2159 = vpop.permute.xlu0 %2158
  %2160 = vrot.lane.b32.xlu0 %v2007, 17
  %v2161 = vpop.permute.xlu0 %2160
  %2162 = vrot.lane.b32.xlu0 %v2027, 17
  %v2163 = vpop.permute.xlu0 %2162
  %2164 = vrot.lane.b32.xlu0 %v2028, 17
  %v2165 = vpop.permute.xlu0 %2164
  %2166 = vrot.lane.b32.xlu0 %v2029, 17
  %v2167 = vpop.permute.xlu0 %2166
  %2168 = vrot.lane.b32.xlu0 %v2030, 17
  %v2169 = vpop.permute.xlu0 %2168
  %2170 = vrot.lane.b32.xlu0 %v2026, 17
  %v2171 = vpop.permute.xlu0 %2170
  %2172 = vrot.lane.b32.xlu0 %v2036, 17
  %v2173 = vpop.permute.xlu0 %2172
  %2174 = vrot.lane.b32.xlu0 %v2043, 17
  %v2175 = vpop.permute.xlu0 %2174
  %2176 = vrot.lane.b32.xlu0 %v2044, 17
  %v2177 = vpop.permute.xlu0 %2176
  %2178 = vrot.lane.b32.xlu0 %v2045, 17
  %v2179 = vpop.permute.xlu0 %2178
  %2180 = vrot.lane.b32.xlu0 %v2042, 17
  %v2181 = vpop.permute.xlu0 %2180
  %2182 = vrot.lane.b32.xlu0 %v2052, 17
  %v2183 = vpop.permute.xlu0 %2182
  %2184 = vrot.lane.b32.xlu0 %v2061, 17
  %v2185 = vpop.permute.xlu0 %2184
  %2186 = vrot.lane.b32.xlu0 %v2062, 17
  %v2187 = vpop.permute.xlu0 %2186
  %2188 = vrot.lane.b32.xlu0 %v2063, 17
  %v2189 = vpop.permute.xlu0 %2188
  %2190 = vrot.lane.b32.xlu0 %v2064, 17
  %v2191 = vpop.permute.xlu0 %2190
  %2192 = vrot.lane.b32.xlu0 %v2071, 17
  %v2193 = vpop.permute.xlu0 %2192
  %2194 = vrot.lane.b32.xlu0 %v2080, 17
  %v2195 = vpop.permute.xlu0 %2194
  %2196 = vrot.lane.b32.xlu0 %v2081, 17
  %v2197 = vpop.permute.xlu0 %2196
  %2198 = vrot.lane.b32.xlu0 %v2082, 17
  %v2199 = vpop.permute.xlu0 %2198
  %2200 = vrot.lane.b32.xlu0 %v2083, 17
  %v2201 = vpop.permute.xlu0 %2200
  %2202 = vrot.lane.b32.xlu0 %v2090, 17
  %v2203 = vpop.permute.xlu0 %2202
  %2204 = vrot.lane.b32.xlu0 %v2099, 17
  %v2205 = vpop.permute.xlu0 %2204
  %2206 = vrot.lane.b32.xlu0 %v2100, 17
  %v2207 = vpop.permute.xlu0 %2206
  %2208 = vrot.lane.b32.xlu0 %v2101, 17
  %v2209 = vpop.permute.xlu0 %2208
  %2210 = vrot.lane.b32.xlu0 %v2102, 17
  %v2211 = vpop.permute.xlu0 %2210
  %2212 = vrot.lane.b32.xlu0 %v2109, 17
  %v2213 = vpop.permute.xlu0 %2212
  %2214 = vrot.lane.b32.xlu0 %v2118, 17
  %v2215 = vpop.permute.xlu0 %2214
  %2216 = vrot.lane.b32.xlu0 %v2119, 17
  %v2217 = vpop.permute.xlu0 %2216
  %2218 = vrot.lane.b32.xlu0 %v2120, 17
  %v2219 = vpop.permute.xlu0 %2218
  %2220 = vrot.lane.b32.xlu0 %v2121, 17
  %v2221 = vpop.permute.xlu0 %2220
  %v2222 = vsel %vm363, %v2133, %v2135
  %v2223 = vsel %vm363, %v2135, %v2137
  %v2224 = vsel %vm363, %v2137, %v2139
  %v2225 = vsel %vm363, %v2139, %v2141
  %v2226 = vsel %vm363, %v2143, %v2145
  %v2227 = vsel %vm363, %v2145, %v2147
  %v2228 = vsel %vm363, %v2147, %v2149
  %v2229 = vsel %vm363, %v2149, %v2151
  %v2230 = vsel %vm363, %v2153, %v2155
  %v2231 = vsel %vm363, %v2155, %v2157
  %v2232 = vsel %vm363, %v2157, %v2159
  %v2233 = vsel %vm363, %v2159, %v2161
  %v2234 = vsel %vm363, %v2163, %v2165
  %v2235 = vsel %vm363, %v2165, %v2167
  %v2236 = vsel %vm363, %v2167, %v2169
  %v2237 = vsel %vm363, %v2169, %v2171
  %v2238 = vsel %vm363, %v2173, %v2175
  %v2239 = vsel %vm363, %v2175, %v2177
  %v2240 = vsel %vm363, %v2177, %v2179
  %v2241 = vsel %vm363, %v2179, %v2181
  %v2242 = vsel %vm363, %v2183, %v2185
  %v2243 = vsel %vm363, %v2185, %v2187
  %v2244 = vsel %vm363, %v2187, %v2189
  %v2245 = vsel %vm363, %v2189, %v2191
  %v2246 = vsel %vm363, %v2193, %v2195
  %v2247 = vsel %vm363, %v2195, %v2197
  %v2248 = vsel %vm363, %v2197, %v2199
  %v2249 = vsel %vm363, %v2199, %v2201
  %v2250 = vsel %vm363, %v2203, %v2205
  %v2251 = vsel %vm363, %v2205, %v2207
  %v2252 = vsel %vm363, %v2207, %v2209
  %v2253 = vsel %vm363, %v2209, %v2211
  %v2254 = vsel %vm363, %v2213, %v2215
  %v2255 = vsel %vm363, %v2215, %v2217
  %v2256 = vsel %vm363, %v2217, %v2219
  %v2257 = vsel %vm363, %v2219, %v2221
  %v2295 = vsel %vm703, %v2122, 0
  %2297 = vmatprep.subr.mxu0 %v2223
  %2298 = vmatpush1.msra.mxu0 %v2222
  %2299 = vmatprep.subr.mxu0 %v2227
  %2300 = vmatpush1.msra.mxu0 %v2226
  %2301 = vmatprep.subr.mxu0 %v2231
  %2302 = vmatpush1.msra.mxu0 %v2230
  %2303 = vmatprep.subr.mxu0 %v2235
  %2304 = vmatpush1.msra.mxu0 %v2234
  %2305 = vmatprep.subr.mxu0 %v2239
  %2306 = vmatpush1.msra.mxu0 %v2238
  %2307 = vmatprep.subr.mxu0 %v2243
  %2308 = vmatpush1.msra.mxu0 %v2242
  %2309 = vmatprep.subr.mxu0 %v2247
  %2310 = vmatpush1.msra.mxu0 %v2246
  %2311 = vmatprep.subr.mxu0 %v2251
  %2312 = vmatpush1.msra.mxu0 %v2250
  %2313 = vmatprep.subr.mxu0 %v2255
  %2314 = vmatpush1.msra.mxu0 %v2254
  %2315 = vmatprep.subr.mxu0 0.0
  %2316 = vmatpush1.msra.mxu0 0.0
  %2317 = vmatprep.subr.mxu0 0.0
  %2318 = vmatpush1.msra.mxu0 0.0
  %2319 = vmatprep.subr.mxu0 0.0
  %2320 = vmatpush1.msra.mxu0 0.0
  %2321 = vmatprep.subr.mxu0 0.0
  %2322 = vmatpush1.msra.mxu0 0.0
  %2323 = vmatprep.subr.mxu0 0.0
  %2324 = vmatpush1.msra.mxu0 0.0
  %2325 = vmatprep.subr.mxu0 0.0
  %2326 = vmatpush1.msra.mxu0 0.0
  %2327 = vmatprep.subr.mxu0 0.0
  %2328 = vmatpush1.msra.mxu0 0.0
  %2329 = vmatprep.subr.mxu0 0.0
  %2330 = vmatpush1.msra.mxu0 0.0
  %2331 = vmatprep.subr.mxu0 0.0
  %2332 = vmatpush1.msra.mxu0 0.0
  %2333 = vmatprep.subr.mxu0 0.0
  %2334 = vmatpush1.msra.mxu0 0.0
  %2335 = vmatprep.subr.mxu0 0.0
  %2336 = vmatpush1.msra.mxu0 0.0
  %2337 = vmatprep.subr.mxu0 0.0
  %2338 = vmatpush1.msra.mxu0 0.0
  %2339 = vmatprep.subr.mxu0 0.0
  %2340 = vmatpush1.msra.mxu0 0.0
  %2341 = vmatprep.subr.mxu0 0.0
  %2342 = vmatpush1.msra.mxu0 0.0
  %2343 = vmatprep.subr.mxu0 0.0
  %2344 = vmatpush1.msra.mxu0 0.0
  %2345 = vmatprep.subr.mxu0 0.0
  %2346 = vmatpush1.msra.mxu0 0.0
  %2347 = vmatprep.subr.mxu0 0.0
  %2348 = vmatpush1.msra.mxu0 0.0
  %2349 = vmatprep.subr.mxu0 0.0
  %2350 = vmatpush1.msra.mxu0 0.0
  %2351 = vmatprep.subr.mxu0 0.0
  %2352 = vmatpush1.msra.mxu0 0.0
  %2353 = vmatprep.subr.mxu0 0.0
  %2354 = vmatpush1.msra.mxu0 0.0
  %2355 = vmatprep.subr.mxu0 0.0
  %2356 = vmatpush1.msra.mxu0 0.0
  %2357 = vmatprep.subr.mxu0 0.0
  %2358 = vmatpush1.msra.mxu0 0.0
  %2359 = vmatprep.subr.mxu0 0.0
  %2360 = vmatpush1.msra.mxu0 0.0
  %2361 = vmatprep.mubr.f32.mxu0 0.0
  %2362 = vmatmul.mubr.f32.gmra.mrb[0].mxu0 %v2295
  %v2363 = vpop.f32.mrb[0].mxu0
  %v2364 = vadd.f32 %v2125, %v2363
  %v2365 = vpop.f32.mrb[0].mxu0
  %v2366 = vadd.f32 %v2125, %v2365
  %2367 = vdwg.mxu0
  %2368 = vmatprep.subr.mxu0 %v2225
  %2369 = vmatpush1.msra.mxu0 %v2224
  %2370 = vmatprep.subr.mxu0 %v2229
  %2371 = vmatpush1.msra.mxu0 %v2228
  %2372 = vmatprep.subr.mxu0 %v2233
  %2373 = vmatpush1.msra.mxu0 %v2232
  %2374 = vmatprep.subr.mxu0 %v2237
  %2375 = vmatpush1.msra.mxu0 %v2236
  %2376 = vmatprep.subr.mxu0 %v2241
  %2377 = vmatpush1.msra.mxu0 %v2240
  %2378 = vmatprep.subr.mxu0 %v2245
  %2379 = vmatpush1.msra.mxu0 %v2244
  %2380 = vmatprep.subr.mxu0 %v2249
  %2381 = vmatpush1.msra.mxu0 %v2248
  %2382 = vmatprep.subr.mxu0 %v2253
  %2383 = vmatpush1.msra.mxu0 %v2252
  %2384 = vmatprep.subr.mxu0 %v2257
  %2385 = vmatpush1.msra.mxu0 %v2256
  %2386 = vmatprep.subr.mxu0 0.0
  %2387 = vmatpush1.msra.mxu0 0.0
  %2388 = vmatprep.subr.mxu0 0.0
  %2389 = vmatpush1.msra.mxu0 0.0
  %2390 = vmatprep.subr.mxu0 0.0
  %2391 = vmatpush1.msra.mxu0 0.0
  %2392 = vmatprep.subr.mxu0 0.0
  %2393 = vmatpush1.msra.mxu0 0.0
  %2394 = vmatprep.subr.mxu0 0.0
  %2395 = vmatpush1.msra.mxu0 0.0
  %2396 = vmatprep.subr.mxu0 0.0
  %2397 = vmatpush1.msra.mxu0 0.0
  %2398 = vmatprep.subr.mxu0 0.0
  %2399 = vmatpush1.msra.mxu0 0.0
  %2400 = vmatprep.subr.mxu0 0.0
  %2401 = vmatpush1.msra.mxu0 0.0
  %2402 = vmatprep.subr.mxu0 0.0
  %2403 = vmatpush1.msra.mxu0 0.0
  %2404 = vmatprep.subr.mxu0 0.0
  %2405 = vmatpush1.msra.mxu0 0.0
  %2406 = vmatprep.subr.mxu0 0.0
  %2407 = vmatpush1.msra.mxu0 0.0
  %2408 = vmatprep.subr.mxu0 0.0
  %2409 = vmatpush1.msra.mxu0 0.0
  %2410 = vmatprep.subr.mxu0 0.0
  %2411 = vmatpush1.msra.mxu0 0.0
  %2412 = vmatprep.subr.mxu0 0.0
  %2413 = vmatpush1.msra.mxu0 0.0
  %2414 = vmatprep.subr.mxu0 0.0
  %2415 = vmatpush1.msra.mxu0 0.0
  %2416 = vmatprep.subr.mxu0 0.0
  %2417 = vmatpush1.msra.mxu0 0.0
  %2418 = vmatprep.subr.mxu0 0.0
  %2419 = vmatpush1.msra.mxu0 0.0
  %2420 = vmatprep.subr.mxu0 0.0
  %2421 = vmatpush1.msra.mxu0 0.0
  %2422 = vmatprep.subr.mxu0 0.0
  %2423 = vmatpush1.msra.mxu0 0.0
  %2424 = vmatprep.subr.mxu0 0.0
  %2425 = vmatpush1.msra.mxu0 0.0
  %2426 = vmatprep.subr.mxu0 0.0
  %2427 = vmatpush1.msra.mxu0 0.0
  %2428 = vmatprep.subr.mxu0 0.0
  %2429 = vmatpush1.msra.mxu0 0.0
  %2430 = vmatprep.subr.mxu0 0.0
  %2431 = vmatpush1.msra.mxu0 0.0
  %2432 = vmatprep.mubr.f32.mxu0 0.0
  %2433 = vmatmul.mubr.f32.gmra.mrb[0].mxu0 %v2295
  %v2434 = vpop.f32.mrb[0].mxu0
  %v2435 = vadd.f32 %v2125, %v2434
  %v2436 = vpop.f32.mrb[0].mxu0
  %v2437 = vadd.f32 %v2125, %v2436
  %2438 = vdwg.mxu0
  %v2439 = vadd.f32 %v2364, %v849
  %v2440 = vadd.f32 %v2366, %v850
  %v2441 = vadd.f32 %v2435, %v851
  %v2442 = vadd.f32 %v2437, %v852
  %v2443 = vmax.f32 %v2439, 0.0
  %v2444 = vmax.f32 %v2440, 0.0
  %v2445 = vmax.f32 %v2441, 0.0
  %v2446 = vmax.f32 %v2442, 0.0
  %2447 = vset.pattern.permute.xlu0 3
  %2448 = vperm.xlu0 %2447, %v31
  %v2449 = vpop.permute.xlu0 %2448
  %v2451 = vmul.f32 %v2443, %v2449
  %v2452 = vmul.f32 %v2444, %v2449
  %v2453 = vmul.f32 %v2445, %v2449
  %v2454 = vmul.f32 %v2446, %v2449
  %v2455 = vrot.slane %v2451, 4
  %v2456 = vadd.f32 %v2451, %v2455
  %v2457 = vrot.slane %v2456, 2
  %v2458 = vadd.f32 %v2456, %v2457
  %v2459 = vrot.slane %v2458, 1
  %v2460 = vadd.f32 %v2458, %v2459
  %v2461 = vrot.slane %v2452, 4
  %v2462 = vadd.f32 %v2452, %v2461
  %v2463 = vrot.slane %v2462, 2
  %v2464 = vadd.f32 %v2462, %v2463
  %v2465 = vrot.slane %v2464, 1
  %v2466 = vadd.f32 %v2464, %v2465
  %v2467 = vrot.slane %v2453, 4
  %v2468 = vadd.f32 %v2453, %v2467
  %v2469 = vrot.slane %v2468, 2
  %v2470 = vadd.f32 %v2468, %v2469
  %v2471 = vrot.slane %v2470, 1
  %v2472 = vadd.f32 %v2470, %v2471
  %v2473 = vrot.slane %v2454, 4
  %v2474 = vadd.f32 %v2454, %v2473
  %v2475 = vrot.slane %v2474, 2
  %v2476 = vadd.f32 %v2474, %v2475
  %v2477 = vrot.slane %v2476, 1
  %v2478 = vadd.f32 %v2476, %v2477
  %v2483 = vcombine.low %v2460, %v2466
  %v2484 = vcombine.low %v2472, %v2478
  %v2486 = vunpack.c.l.s4 1966171168
  %v2487 = vunpack.c.0.s8 %v2486
  %v2488 = vlaneseq
  %v2489 = vshrl.u32 %v2488, 7
  %v2490 = vsub.s32 %v2487, %v2489
  %v2491 = vrot.slane %v2483, %v2490
  %v2493 = vunpack.c.l.s4 1966171168
  %v2494 = vunpack.c.0.s8 %v2493
  %v2495 = vlaneseq
  %v2496 = vshrl.u32 %v2495, 7
  %v2497 = vsub.s32 %v2494, %v2496
  %v2498 = vrot.slane %v2484, %v2497
  %v2499 = vcombine.low %v2491, %v2498
  %v2501 = vunpack.c.l.s4 1966171168
  %v2502 = vunpack.c.0.s8 %v2501
  %v2503 = vlaneseq
  %v2504 = vshrl.u32 %v2503, 7
  %v2505 = vsub.s32 %v2502, %v2504
  %v2506 = vrot.slane %v2499, %v2505
  %v2508 = vlaneseq
  %vm2509 = vcmp.ge.s32.totalorder %v2508, 0
  %vm2510 = vcmp.lt.s32.totalorder %v2508, 512
  %vm2511 = vmand %vm2509, %vm2510
  %s2512 = scalar_lea.vmem [#allocation2], 8
  %2513 = vst.msk [vmem:[%s2512] ss:$8 sm:$0xf] %vm2511, %v2506
  %2514 = vst.msk [vmem:[%s2512] ss:$8 sm:$0x0] %vm2511, %v2506
  %s2515 = scalar_lea.vmem [#allocation2], 8
  %v2516 = vld [vmem:[%s2515] ss:$8 sm:$0xf]
  %v2517 = vld [vmem:[%s2515] ss:$8 sm:$0x10]
  %v2518 = vor.u32 %v2516, %v2517
  %v2520 = vlaneseq
  %v2521 = vshrl.u32 %v2520, 7
  %v2522 = vsub.s32 0, %v2521
  %v2523 = vrot.slane %v2518, %v2522
  %v2524 = vlaneseq
  %v2525 = vshrl.u32 %v2524, 7
  %v2526 = vsub.s32 1, %v2525
  %v2527 = vrot.slane %v2518, %v2526
  %v2528 = vlaneseq
  %v2529 = vshrl.u32 %v2528, 7
  %v2530 = vsub.s32 2, %v2529
  %v2531 = vrot.slane %v2518, %v2530
  %v2532 = vlaneseq
  %v2533 = vshrl.u32 %v2532, 7
  %v2534 = vsub.s32 3, %v2533
  %v2535 = vrot.slane %v2518, %v2534
  %v2536 = vlaneseq
  %v2537 = vshrl.u32 %v2536, 7
  %v2538 = vsub.s32 4, %v2537
  %v2539 = vrot.slane %v2518, %v2538
  %2540 = vrot.lane.b32.xlu0 %v2523, 112
  %v2541 = vpop.permute.xlu0 %2540
  %2542 = vrot.lane.b32.xlu0 %v2527, 112
  %v2543 = vpop.permute.xlu0 %2542
  %2544 = vrot.lane.b32.xlu0 %v2531, 112
  %v2545 = vpop.permute.xlu0 %2544
  %2546 = vrot.lane.b32.xlu0 %v2535, 112
  %v2547 = vpop.permute.xlu0 %2546
  %2548 = vrot.lane.b32.xlu0 %v2539, 112
  %v2549 = vpop.permute.xlu0 %2548
  %v2550 = vsel %vm112, %v2541, %v2543
  %v2551 = vsel %vm112, %v2543, %v2545
  %v2552 = vsel %vm112, %v2545, %v2547
  %v2553 = vsel %vm112, %v2547, %v2549
  %v2558 = vadd.f32 %v2460, %v2550
  %v2559 = vadd.f32 %v2466, %v2551
  %v2560 = vadd.f32 %v2472, %v2552
  %v2561 = vadd.f32 %v2478, %v2553
  %v2562 = vmul.f32 %v2558, 0.5
  %v2563 = vmul.f32 %v2559, 0.5
  %v2564 = vmul.f32 %v2560, 0.5
  %v2565 = vmul.f32 %v2561, 0.5
  %v2566 = vld [vmem:[%s5] sm:$0xf]
  %v2568 = vlaneseq
  %v2569 = vshrl.u32 %v2568, 7
  %v2570 = vsub.s32 0, %v2569
  %v2571 = vrot.slane %v2566, %v2570
  %v2572 = vlaneseq
  %v2573 = vshrl.u32 %v2572, 7
  %v2574 = vsub.s32 1, %v2573
  %v2575 = vrot.slane %v2566, %v2574
  %v2576 = vlaneseq
  %v2577 = vshrl.u32 %v2576, 7
  %v2578 = vsub.s32 2, %v2577
  %v2579 = vrot.slane %v2566, %v2578
  %v2580 = vlaneseq
  %v2581 = vshrl.u32 %v2580, 7
  %v2582 = vsub.s32 3, %v2581
  %v2583 = vrot.slane %v2566, %v2582
  %v2588 = vadd.f32 %v2562, %v2571
  %v2589 = vadd.f32 %v2563, %v2575
  %v2590 = vadd.f32 %v2564, %v2579
  %v2591 = vadd.f32 %v2565, %v2583
  %v2592 = vmul.f32 %v2588, 0.31830987
  %v2593 = vmul.f32 %v2589, 0.31830987
  %v2594 = vmul.f32 %v2590, 0.31830987
  %v2595 = vmul.f32 %v2591, 0.31830987
  %v2596 = vadd.f32 %v2592, 0.5
  %v2597 = vadd.f32 %v2593, 0.5
  %v2598 = vadd.f32 %v2594, 0.5
  %v2599 = vadd.f32 %v2595, 0.5
  %v2600 = vfloor.f32 %v2596
  %v2601 = vfloor.f32 %v2597
  %v2602 = vfloor.f32 %v2598
  %v2603 = vfloor.f32 %v2599
  %v2604 = vmul.f32 %v2600, 3.1415927
  %v2605 = vmul.f32 %v2601, 3.1415927
  %v2606 = vmul.f32 %v2602, 3.1415927
  %v2607 = vmul.f32 %v2603, 3.1415927
  %v2608 = vsub.f32 %v2588, %v2604
  %v2609 = vsub.f32 %v2589, %v2605
  %v2610 = vsub.f32 %v2590, %v2606
  %v2611 = vsub.f32 %v2591, %v2607
  %v2612 = vmul.f32 %v2600, 0.5
  %v2613 = vmul.f32 %v2601, 0.5
  %v2614 = vmul.f32 %v2602, 0.5
  %v2615 = vmul.f32 %v2603, 0.5
  %v2616 = vfloor.f32 %v2612
  %v2617 = vfloor.f32 %v2613
  %v2618 = vfloor.f32 %v2614
  %v2619 = vfloor.f32 %v2615
  %v2620 = vmul.f32 %v2616, 2.0
  %v2621 = vmul.f32 %v2617, 2.0
  %v2622 = vmul.f32 %v2618, 2.0
  %v2623 = vmul.f32 %v2619, 2.0
  %v2624 = vsub.f32 %v2600, %v2620
  %v2625 = vsub.f32 %v2601, %v2621
  %v2626 = vsub.f32 %v2602, %v2622
  %v2627 = vsub.f32 %v2603, %v2623
  %v2628 = vmul.f32 %v2624, 2.0
  %v2629 = vmul.f32 %v2625, 2.0
  %v2630 = vmul.f32 %v2626, 2.0
  %v2631 = vmul.f32 %v2627, 2.0
  %v2632 = vsub.f32 1.0, %v2628
  %v2633 = vsub.f32 1.0, %v2629
  %v2634 = vsub.f32 1.0, %v2630
  %v2635 = vsub.f32 1.0, %v2631
  %v2636 = vmul.f32 %v2608, %v2608
  %v2637 = vmul.f32 %v2609, %v2609
  %v2638 = vmul.f32 %v2610, %v2610
  %v2639 = vmul.f32 %v2611, %v2611
  %v2640 = vmul.f32 %v2636, -2.5052108e-08
  %v2641 = vmul.f32 %v2637, -2.5052108e-08
  %v2642 = vmul.f32 %v2638, -2.5052108e-08
  %v2643 = vmul.f32 %v2639, -2.5052108e-08
  %v2644 = vadd.f32 %v2640, 2.7557319e-06
  %v2645 = vadd.f32 %v2641, 2.7557319e-06
  %v2646 = vadd.f32 %v2642, 2.7557319e-06
  %v2647 = vadd.f32 %v2643, 2.7557319e-06
  %v2648 = vmul.f32 %v2636, %v2644
  %v2649 = vmul.f32 %v2637, %v2645
  %v2650 = vmul.f32 %v2638, %v2646
  %v2651 = vmul.f32 %v2639, %v2647
  %v2652 = vadd.f32 %v2648, -0.0001984127
  %v2653 = vadd.f32 %v2649, -0.0001984127
  %v2654 = vadd.f32 %v2650, -0.0001984127
  %v2655 = vadd.f32 %v2651, -0.0001984127
  %v2656 = vmul.f32 %v2636, %v2652
  %v2657 = vmul.f32 %v2637, %v2653
  %v2658 = vmul.f32 %v2638, %v2654
  %v2659 = vmul.f32 %v2639, %v2655
  %v2660 = vadd.f32 %v2656, 0.008333334
  %v2661 = vadd.f32 %v2657, 0.008333334
  %v2662 = vadd.f32 %v2658, 0.008333334
  %v2663 = vadd.f32 %v2659, 0.008333334
  %v2664 = vmul.f32 %v2636, %v2660
  %v2665 = vmul.f32 %v2637, %v2661
  %v2666 = vmul.f32 %v2638, %v2662
  %v2667 = vmul.f32 %v2639, %v2663
  %v2668 = vadd.f32 %v2664, -0.16666667
  %v2669 = vadd.f32 %v2665, -0.16666667
  %v2670 = vadd.f32 %v2666, -0.16666667
  %v2671 = vadd.f32 %v2667, -0.16666667
  %v2672 = vmul.f32 %v2636, %v2668
  %v2673 = vmul.f32 %v2637, %v2669
  %v2674 = vmul.f32 %v2638, %v2670
  %v2675 = vmul.f32 %v2639, %v2671
  %v2676 = vadd.f32 %v2672, 1.0
  %v2677 = vadd.f32 %v2673, 1.0
  %v2678 = vadd.f32 %v2674, 1.0
  %v2679 = vadd.f32 %v2675, 1.0
  %v2680 = vmul.f32 %v2636, -2.755732e-07
  %v2681 = vmul.f32 %v2637, -2.755732e-07
  %v2682 = vmul.f32 %v2638, -2.755732e-07
  %v2683 = vmul.f32 %v2639, -2.755732e-07
  %v2684 = vadd.f32 %v2680, 2.4801588e-05
  %v2685 = vadd.f32 %v2681, 2.4801588e-05
  %v2686 = vadd.f32 %v2682, 2.4801588e-05
  %v2687 = vadd.f32 %v2683, 2.4801588e-05
  %v2688 = vmul.f32 %v2636, %v2684
  %v2689 = vmul.f32 %v2637, %v2685
  %v2690 = vmul.f32 %v2638, %v2686
  %v2691 = vmul.f32 %v2639, %v2687
  %v2692 = vadd.f32 %v2688, -0.0013888889
  %v2693 = vadd.f32 %v2689, -0.0013888889
  %v2694 = vadd.f32 %v2690, -0.0013888889
  %v2695 = vadd.f32 %v2691, -0.0013888889
  %v2696 = vmul.f32 %v2636, %v2692
  %v2697 = vmul.f32 %v2637, %v2693
  %v2698 = vmul.f32 %v2638, %v2694
  %v2699 = vmul.f32 %v2639, %v2695
  %v2700 = vadd.f32 %v2696, 0.041666668
  %v2701 = vadd.f32 %v2697, 0.041666668
  %v2702 = vadd.f32 %v2698, 0.041666668
  %v2703 = vadd.f32 %v2699, 0.041666668
  %v2704 = vmul.f32 %v2636, %v2700
  %v2705 = vmul.f32 %v2637, %v2701
  %v2706 = vmul.f32 %v2638, %v2702
  %v2707 = vmul.f32 %v2639, %v2703
  %v2708 = vadd.f32 %v2704, -0.5
  %v2709 = vadd.f32 %v2705, -0.5
  %v2710 = vadd.f32 %v2706, -0.5
  %v2711 = vadd.f32 %v2707, -0.5
  %v2712 = vmul.f32 %v2636, %v2708
  %v2713 = vmul.f32 %v2637, %v2709
  %v2714 = vmul.f32 %v2638, %v2710
  %v2715 = vmul.f32 %v2639, %v2711
  %v2716 = vadd.f32 %v2712, 1.0
  %v2717 = vadd.f32 %v2713, 1.0
  %v2718 = vadd.f32 %v2714, 1.0
  %v2719 = vadd.f32 %v2715, 1.0
  %v2720 = vmul.f32 %v2608, %v2676
  %v2721 = vmul.f32 %v2609, %v2677
  %v2722 = vmul.f32 %v2610, %v2678
  %v2723 = vmul.f32 %v2611, %v2679
  %v2724 = vmul.f32 %v2632, %v2720
  %v2725 = vmul.f32 %v2633, %v2721
  %v2726 = vmul.f32 %v2634, %v2722
  %v2727 = vmul.f32 %v2635, %v2723
  %v2728 = vmul.f32 %v2632, %v2716
  %v2729 = vmul.f32 %v2633, %v2717
  %v2730 = vmul.f32 %v2634, %v2718
  %v2731 = vmul.f32 %v2635, %v2719
  %v2736 = vcombine.low %v2588, %v2589
  %v2737 = vcombine.low %v2590, %v2591
  %v2739 = vunpack.c.l.s4 1966171168
  %v2740 = vunpack.c.0.s8 %v2739
  %v2741 = vlaneseq
  %v2742 = vshrl.u32 %v2741, 7
  %v2743 = vsub.s32 %v2740, %v2742
  %v2744 = vrot.slane %v2736, %v2743
  %v2746 = vunpack.c.l.s4 1966171168
  %v2747 = vunpack.c.0.s8 %v2746
  %v2748 = vlaneseq
  %v2749 = vshrl.u32 %v2748, 7
  %v2750 = vsub.s32 %v2747, %v2749
  %v2751 = vrot.slane %v2737, %v2750
  %v2752 = vcombine.low %v2744, %v2751
  %v2754 = vunpack.c.l.s4 1966171168
  %v2755 = vunpack.c.0.s8 %v2754
  %v2756 = vlaneseq
  %v2757 = vshrl.u32 %v2756, 7
  %v2758 = vsub.s32 %v2755, %v2757
  %v2759 = vrot.slane %v2752, %v2758
  %2761 = vst.msk [vmem:[%s7] sm:$0xf] %vm2511, %v2759
  %v2766 = vcombine.low %v2728, %v2729
  %v2767 = vcombine.low %v2730, %v2731
  %v2769 = vunpack.c.l.s4 1966171168
  %v2770 = vunpack.c.0.s8 %v2769
  %v2771 = vlaneseq
  %v2772 = vshrl.u32 %v2771, 7
  %v2773 = vsub.s32 %v2770, %v2772
  %v2774 = vrot.slane %v2766, %v2773
  %v2776 = vunpack.c.l.s4 1966171168
  %v2777 = vunpack.c.0.s8 %v2776
  %v2778 = vlaneseq
  %v2779 = vshrl.u32 %v2778, 7
  %v2780 = vsub.s32 %v2777, %v2779
  %v2781 = vrot.slane %v2767, %v2780
  %v2782 = vcombine.low %v2774, %v2781
  %v2784 = vunpack.c.l.s4 1966171168
  %v2785 = vunpack.c.0.s8 %v2784
  %v2786 = vlaneseq
  %v2787 = vshrl.u32 %v2786, 7
  %v2788 = vsub.s32 %v2785, %v2787
  %v2789 = vrot.slane %v2782, %v2788
  %2791 = vst.msk [vmem:[%s8] sm:$0xf] %vm2511, %v2789
  %v2796 = vcombine.low %v2724, %v2725
  %v2797 = vcombine.low %v2726, %v2727
  %v2799 = vunpack.c.l.s4 1966171168
  %v2800 = vunpack.c.0.s8 %v2799
  %v2801 = vlaneseq
  %v2802 = vshrl.u32 %v2801, 7
  %v2803 = vsub.s32 %v2800, %v2802
  %v2804 = vrot.slane %v2796, %v2803
  %v2806 = vunpack.c.l.s4 1966171168
  %v2807 = vunpack.c.0.s8 %v2806
  %v2808 = vlaneseq
  %v2809 = vshrl.u32 %v2808, 7
  %v2810 = vsub.s32 %v2807, %v2809
  %v2811 = vrot.slane %v2797, %v2810
  %v2812 = vcombine.low %v2804, %v2811
  %v2814 = vunpack.c.l.s4 1966171168
  %v2815 = vunpack.c.0.s8 %v2814
  %v2816 = vlaneseq
  %v2817 = vshrl.u32 %v2816, 7
  %v2818 = vsub.s32 %v2815, %v2817
  %v2819 = vrot.slane %v2812, %v2818
  %2821 = vst.msk [vmem:[%s9] sm:$0xf] %vm2511, %v2819
  // Predicated region
  $region30: #{rersm_forward.1} parent=0 // pred_check
    _
  $region31: #{rersm_forward.1} parent=0 // pred_check_branch
    %2823 = sbr.rel (0) target = $region33
  $region32: #{rersm_forward.1} parent=0 // pred_region
    _
  $region33: #{rersm_forward.1} parent=0 // pred_fallthru
    _
  // Predicated region
  $region34: #{rersm_forward.1} parent=0 // pred_check
    _
  $region35: #{rersm_forward.1} parent=0 // pred_check_branch
    %2825 = sbr.rel (0) target = $region37
  $region36: #{rersm_forward.1} parent=0 // pred_region
    _
  $region37: #{rersm_forward.1} parent=0 // pred_fallthru
    _
  // Predicated region
  $region38: #{rersm_forward.1} parent=0 // pred_check
    _
  $region39: #{rersm_forward.1} parent=0 // pred_check_branch
    %2827 = sbr.rel (0) target = $region41
  $region40: #{rersm_forward.1} parent=0 // pred_region
    _
  $region41: #{rersm_forward.1} parent=0 // pred_fallthru
    _
  // Predicated region
  $region42: #{rersm_forward.1} parent=0 // pred_check
    _
  $region43: #{rersm_forward.1} parent=0 // pred_check_branch
    %2829 = sbr.rel (0) target = $region45
  $region44: #{rersm_forward.1} parent=0 // pred_region
    _
  $region45: #{rersm_forward.1} parent=0 // pred_fallthru
    _
  // Predicated region
  $region46: #{rersm_forward.1} parent=0 // pred_check
    _
  $region47: #{rersm_forward.1} parent=0 // pred_check_branch
    %2831 = sbr.rel (0) target = $region49
  $region48: #{rersm_forward.1} parent=0 // pred_region
    _
  $region49: #{rersm_forward.1} parent=0 // pred_fallthru
    _
  // Predicated region
  $region50: #{rersm_forward.1} parent=0 // pred_check
    _
  $region51: #{rersm_forward.1} parent=0 // pred_check_branch
    %2833 = sbr.rel (0) target = $region53
  $region52: #{rersm_forward.1} parent=0 // pred_region
    _
  $region53: #{rersm_forward.1} parent=0 // pred_fallthru
    _

</llo_original>
